<compile_context>
chip_gen: v7x
topology: tpu7x:2x2x1
jax: 0.10.0
libtpu: 0.0.40
codegen_flags: <defaults>
</compile_context>

<pallas_src>
import jax
import jax.numpy as jnp
from jax.experimental import pallas as pl
from jax.experimental.pallas import tpu as pltpu

# ----------------------------------------------------------------------------
# Synthetic "tiny BERT" config (stand-in for the 768-hidden pretrained model).
# ----------------------------------------------------------------------------
VOCAB        = 100
TYPE_VOCAB   = 2
MAX_POS      = 16
HIDDEN       = 32
NUM_HEADS    = 4
HEAD_DIM     = HIDDEN // NUM_HEADS
INTERMEDIATE = 64
NUM_LAYERS   = 2
NUM_CLASSES  = 3
CLS_PAD      = 128          # classifier output padded to a full lane width (lane-dense store)
LN_EPS       = 1e-12


# ----------------------------------------------------------------------------
# In-kernel helpers
# ----------------------------------------------------------------------------
def _layernorm(x, gamma, beta):
    mu = jnp.mean(x, axis=-1, keepdims=True)
    var = jnp.mean((x - mu) ** 2, axis=-1, keepdims=True)
    return (x - mu) * jax.lax.rsqrt(var + LN_EPS) * gamma + beta


def _linear(x, w, b):
    # y = x @ W + b with W already stored [in, out]: plain (M,K)x(K,N) on the MXU.
    # bf16 operands, f32 accumulation; bias add in f32.
    y = jax.lax.dot_general(x.astype(jnp.bfloat16), w.astype(jnp.bfloat16),
                            (((1,), (0,)), ((), ())),
                            preferred_element_type=jnp.float32)
    return y + b


def _gelu(x):
    # TODO(synk): BERT uses exact erf-GELU; tanh approximation used here (erf lowering not guaranteed).
    c = 0.7978845608028654  # sqrt(2/pi)
    return 0.5 * x * (1.0 + jnp.tanh(c * (x + 0.044715 * x * x * x)))


# ----------------------------------------------------------------------------
# Fused kernel, grid = (batch, layer):
#   layer 0: embedding LayerNorm into resident scratch
#   every layer: attention + FFN, activations kept in VMEM scratch
#   last layer: pooler(tanh on [CLS]) + classifier, lane-dense (1,128) store
# ----------------------------------------------------------------------------
def fused_bert_kernel(emb_ref, amask_ref, embln_ref,
                      wqkv_ref, bqkv_ref, wo_ref, bo_ref, ln1_ref,
                      wi_ref, bi_ref, wo2_ref, bo2_ref, ln2_ref,
                      wp_ref, bp_ref, wc_ref, bc_ref,
                      logits_ref, x_ref):
    layer = pl.program_id(1)
    S, H = emb_ref.shape
    scale = 1.0 / (HEAD_DIM ** 0.5)

    # ---- layer 0: embedding LayerNorm (hidden/embedding dropout = identity at eval) ----
    @pl.when(layer == 0)
    def _():
        x_ref[...] = _layernorm(emb_ref[...], embln_ref[0:1, :], embln_ref[1:2, :])

    x2 = x_ref[...]                                           # (S, H) f32, resident activations

    # ---- fused QKV projection: one (S,H) x (H,3H) matmul ----
    qkv = _linear(x2, wqkv_ref[...], bqkv_ref[...])           # (S, 3H) f32
    q = qkv[:, 0:H] * scale                                   # fold 1/sqrt(d) into q once
    k = qkv[:, H:2 * H]
    v = qkv[:, 2 * H:3 * H]

    # ---- heads stacked on the leading axis -> one batched attention per layer ----
    # TODO(synk): replace slice+stack with a single pltpu.einshape relayout once verified.
    def split_heads(t):                                       # (S, H) -> (NH, S, d)
        return jnp.stack(
            [t[:, h * HEAD_DIM:(h + 1) * HEAD_DIM] for h in range(NUM_HEADS)], axis=0)

    qh = split_heads(q).astype(jnp.bfloat16)
    kh = split_heads(k).astype(jnp.bfloat16)
    vh = split_heads(v).astype(jnp.bfloat16)

    s = jax.lax.dot_general(qh, kh, (((2,), (2,)), ((0,), (0,))),
                            preferred_element_type=jnp.float32)       # (NH, S, S)
    s = s + amask_ref[...]                                            # (1,S) broadcast: free VPU add
    s = s - jnp.max(s, axis=-1, keepdims=True)
    p = jnp.exp(s)
    p = p * pl.reciprocal(jnp.sum(p, axis=-1, keepdims=True), approx=True)
    ctx = jax.lax.dot_general(p.astype(jnp.bfloat16), vh,
                              (((2,), (1,)), ((0,), (0,))),
                              preferred_element_type=jnp.float32)     # (NH, S, d)

    # ---- merge heads (lane concat), single output projection ----
    ctx_full = jnp.concatenate([ctx[h] for h in range(NUM_HEADS)], axis=-1)   # (S, H)
    attn = _linear(ctx_full, wo_ref[...], bo_ref[...])                        # (S, H)
    h1 = _layernorm(attn + x2, ln1_ref[0:1, :], ln1_ref[1:2, :])              # attn residual + LN

    # ---- feed-forward ----
    ff = _gelu(_linear(h1, wi_ref[...], bi_ref[...]))                         # (S, I)
    ff = _linear(ff, wo2_ref[...], bo2_ref[...])                              # (S, H)
    x_new = _layernorm(ff + h1, ln2_ref[0:1, :], ln2_ref[1:2, :])             # FFN residual + LN
    x_ref[...] = x_new                                                        # carry to next layer

    # ---- last layer: pooler on [CLS] + dropout(eval)=identity + classifier ----
    @pl.when(layer == pl.num_programs(1) - 1)
    def _():
        cls = x_new[0:1, :]                                                   # (1, H)
        pooled = jnp.tanh(_linear(cls, wp_ref[...], bp_ref[...]))             # (1, H)
        logits_ref[...] = _linear(pooled, wc_ref[...], bc_ref[...])           # (1, CLS_PAD)


def fused_forward(emb, amask, p):
    B, S, H = emb.shape
    I = INTERMEDIATE
    grid = (B, NUM_LAYERS)

    in_specs = [
        pl.BlockSpec((None, S, H),     lambda b, l: (b, 0, 0)),   # emb        (per sequence)
        pl.BlockSpec((None, 1, S),     lambda b, l: (b, 0, 0)),   # amask      (per sequence)
        pl.BlockSpec((2, H),           lambda b, l: (0, 0)),      # emb LN
        pl.BlockSpec((None, H, 3 * H), lambda b, l: (l, 0, 0)),   # wqkv       (per layer)
        pl.BlockSpec((None, 1, 3 * H), lambda b, l: (l, 0, 0)),   # bqkv
        pl.BlockSpec((None, H, H),     lambda b, l: (l, 0, 0)),   # wo
        pl.BlockSpec((None, 1, H),     lambda b, l: (l, 0, 0)),   # bo
        pl.BlockSpec((None, 2, H),     lambda b, l: (l, 0, 0)),   # ln1
        pl.BlockSpec((None, H, I),     lambda b, l: (l, 0, 0)),   # wi
        pl.BlockSpec((None, 1, I),     lambda b, l: (l, 0, 0)),   # bi
        pl.BlockSpec((None, I, H),     lambda b, l: (l, 0, 0)),   # wo2
        pl.BlockSpec((None, 1, H),     lambda b, l: (l, 0, 0)),   # bo2
        pl.BlockSpec((None, 2, H),     lambda b, l: (l, 0, 0)),   # ln2
        pl.BlockSpec((H, H),           lambda b, l: (0, 0)),      # pooler W
        pl.BlockSpec((1, H),           lambda b, l: (0, 0)),      # pooler b
        pl.BlockSpec((H, CLS_PAD),     lambda b, l: (0, 0)),      # classifier W (padded)
        pl.BlockSpec((1, CLS_PAD),     lambda b, l: (0, 0)),      # classifier b (padded)
    ]
    out_spec = pl.BlockSpec((None, 1, CLS_PAD), lambda b, l: (b, 0, 0))

    return pl.pallas_call(
        fused_bert_kernel,
        out_shape=jax.ShapeDtypeStruct((B, 1, CLS_PAD), jnp.float32),
        grid_spec=pltpu.PrefetchScalarGridSpec(
            num_scalar_prefetch=0,
            grid=grid,
            in_specs=in_specs,
            out_specs=out_spec,
            scratch_shapes=[pltpu.VMEM((S, H), jnp.float32)],     # resident activations
        ),
        compiler_params=pltpu.CompilerParams(
            dimension_semantics=("parallel", "arbitrary"),        # batch || , layer sequential
            vmem_limit_bytes=32 * 1024 * 1024,
        ),
    )(emb, amask, p["emb_ln"],
      p["wqkv"], p["bqkv"], p["wo"], p["bo"], p["ln1"],
      p["wi"], p["bi"], p["wo2"], p["bo2"], p["ln2"],
      p["pool_w"], p["pool_b"], p["cls_w"], p["cls_b"])


# ----------------------------------------------------------------------------
# Parameters (deterministic synthetic init — no checkpoint load).
# All linear weights stored pre-transposed [in_features, out_features].
# ----------------------------------------------------------------------------
def init_params(key):
    keys = iter(jax.random.split(key, 64))

    def w(shape, dtype=jnp.bfloat16, scale=0.02):
        return (scale * jax.random.normal(next(keys), shape)).astype(dtype)

    def zeros(shape):
        return jnp.zeros(shape, jnp.float32)

    def ln_stack(n):
        # gamma=1 (row 0), beta=0 (row 1) per layer  ->  (n, 2, H)
        return jnp.stack([jnp.ones((n, HIDDEN), jnp.float32),
                          jnp.zeros((n, HIDDEN), jnp.float32)], axis=1)

    L = NUM_LAYERS
    # Classifier weight padded to CLS_PAD output columns; columns >= NUM_CLASSES are zero.
    cls_w = jnp.zeros((HIDDEN, CLS_PAD), jnp.float32).at[:, :NUM_CLASSES].set(
        0.02 * jax.random.normal(next(keys), (HIDDEN, NUM_CLASSES)))

    return {
        # embeddings (gathers stay in plain JAX)
        "word_emb": w((VOCAB, HIDDEN), jnp.float32),
        "pos_emb":  w((MAX_POS, HIDDEN), jnp.float32),
        "type_emb": w((TYPE_VOCAB, HIDDEN), jnp.float32),
        "emb_ln":   ln_stack(1)[0],                            # (2, H)
        # per-layer slabs, stacked over layers, [in, out] layout
        "wqkv": w((L, HIDDEN, 3 * HIDDEN)),                    # columns = Q | K | V
        "bqkv": zeros((L, 1, 3 * HIDDEN)),
        "wo":   w((L, HIDDEN, HIDDEN)),
        "bo":   zeros((L, 1, HIDDEN)),
        "ln1":  ln_stack(L),                                   # (L, 2, H)
        "wi":   w((L, HIDDEN, INTERMEDIATE)),
        "bi":   zeros((L, 1, INTERMEDIATE)),
        "wo2":  w((L, INTERMEDIATE, HIDDEN)),
        "bo2":  zeros((L, 1, HIDDEN)),
        "ln2":  ln_stack(L),
        # pooler + classifier
        "pool_w": w((HIDDEN, HIDDEN)),
        "pool_b": zeros((1, HIDDEN)),
        "cls_w":  cls_w.astype(jnp.bfloat16),
        "cls_b":  zeros((1, CLS_PAD)),
    }


# ----------------------------------------------------------------------------
# Full forward = BertModel(...) -> pooled_output -> dropout(eval) -> classifier
# ----------------------------------------------------------------------------
@jax.jit
def custom_bert_classifier(params, input_ids, attention_mask, token_type_ids):
    B, S = input_ids.shape
    # Embedding gathers are glue in plain JAX (low priority to fuse at toy size).
    pos = jnp.arange(S, dtype=jnp.int32)
    emb = (params["word_emb"][input_ids]
           + params["pos_emb"][pos][None, :, :]
           + params["type_emb"][token_type_ids]).astype(jnp.float32)
    # Additive (extended) attention mask: 0 for keep, -1e4 for masked positions.
    amask = ((1.0 - attention_mask.astype(jnp.float32)) * -10000.0)[:, None, :]  # (B, 1, S)

    logits_padded = fused_forward(emb, amask, params)          # (B, 1, CLS_PAD)
    return logits_padded[:, 0, :NUM_CLASSES]


if __name__ == "__main__":
    key = jax.random.PRNGKey(0)
    pkey, ikey = jax.random.split(key)
    params = init_params(pkey)

    B, S = 2, 8
    input_ids = jax.random.randint(ikey, (B, S), 0, VOCAB, dtype=jnp.int32)
    token_type_ids = jnp.zeros((B, S), dtype=jnp.int32)
    attention_mask = jnp.ones((B, S), dtype=jnp.int32).at[:, S - 2:].set(0)  # last 2 tokens = pad

    logits = custom_bert_classifier(params, input_ids, attention_mask, token_type_ids)
    jax.block_until_ready(logits)
    assert logits.shape == (B, NUM_CLASSES) and logits.dtype == jnp.float32
    assert bool(jnp.all(jnp.isfinite(logits)))
    print("KERNEL_OK")
</pallas_src>

<mosaic_0001>
module attributes {stable_mosaic.version = 11 : i64} {
  func.func @fused_bert_kernel(%arg0: i32, %arg1: i32, %arg2: memref<1x8x32xf32, #tpu.memory_space<vmem>>, %arg3: memref<1x1x8xf32, #tpu.memory_space<vmem>>, %arg4: memref<2x32xf32, #tpu.memory_space<vmem>>, %arg5: memref<1x32x96xbf16, #tpu.memory_space<vmem>>, %arg6: memref<1x1x96xf32, #tpu.memory_space<vmem>>, %arg7: memref<1x32x32xbf16, #tpu.memory_space<vmem>>, %arg8: memref<1x1x32xf32, #tpu.memory_space<vmem>>, %arg9: memref<1x2x32xf32, #tpu.memory_space<vmem>>, %arg10: memref<1x32x64xbf16, #tpu.memory_space<vmem>>, %arg11: memref<1x1x64xf32, #tpu.memory_space<vmem>>, %arg12: memref<1x64x32xbf16, #tpu.memory_space<vmem>>, %arg13: memref<1x1x32xf32, #tpu.memory_space<vmem>>, %arg14: memref<1x2x32xf32, #tpu.memory_space<vmem>>, %arg15: memref<32x32xbf16, #tpu.memory_space<vmem>>, %arg16: memref<1x32xf32, #tpu.memory_space<vmem>>, %arg17: memref<32x128xbf16, #tpu.memory_space<vmem>>, %arg18: memref<1x128xf32, #tpu.memory_space<vmem>>, %arg19: memref<1x1x128xf32, #tpu.memory_space<vmem>>, %arg20: memref<8x32xf32, #tpu.memory_space<vmem>>) attributes {dimension_semantics = [#tpu.dimension_semantics<parallel>, #tpu.dimension_semantics<arbitrary>], iteration_bounds = array<i64: 2, 2>, scalar_prefetch = 0 : i64, scratch_operands = 1 : i64, tpu.core_type = #tpu.core_type<tc>, window_params = [{transform_indices = @transform_0, window_bounds = array<i64: 1, 8, 32>}, {transform_indices = @transform_1, window_bounds = array<i64: 1, 1, 8>}, {pipeline_mode = #tpu.pipeline_mode<synchronous>, transform_indices = @transform_2, window_bounds = array<i64: 2, 32>}, {transform_indices = @transform_3, window_bounds = array<i64: 1, 32, 96>}, {transform_indices = @transform_4, window_bounds = array<i64: 1, 1, 96>}, {transform_indices = @transform_5, window_bounds = array<i64: 1, 32, 32>}, {transform_indices = @transform_6, window_bounds = array<i64: 1, 1, 32>}, {transform_indices = @transform_7, window_bounds = array<i64: 1, 2, 32>}, {transform_indices = @transform_8, window_bounds = array<i64: 1, 32, 64>}, {transform_indices = @transform_9, window_bounds = array<i64: 1, 1, 64>}, {transform_indices = @transform_10, window_bounds = array<i64: 1, 64, 32>}, {transform_indices = @transform_11, window_bounds = array<i64: 1, 1, 32>}, {transform_indices = @transform_12, window_bounds = array<i64: 1, 2, 32>}, {pipeline_mode = #tpu.pipeline_mode<synchronous>, transform_indices = @transform_13, window_bounds = array<i64: 32, 32>}, {pipeline_mode = #tpu.pipeline_mode<synchronous>, transform_indices = @transform_14, window_bounds = array<i64: 1, 32>}, {pipeline_mode = #tpu.pipeline_mode<synchronous>, transform_indices = @transform_15, window_bounds = array<i64: 32, 128>}, {pipeline_mode = #tpu.pipeline_mode<synchronous>, transform_indices = @transform_16, window_bounds = array<i64: 1, 128>}, {transform_indices = @transform_17, window_bounds = array<i64: 1, 1, 128>}]} {
    %c0_i32 = arith.constant 0 : i32
    %0 = arith.cmpi eq, %arg1, %c0_i32 : i32
    %1 = arith.extui %0 : i1 to i32
    %c0_i32_0 = arith.constant 0 : i32
    %2 = arith.cmpi ne, %1, %c0_i32_0 : i32
    scf.if %2 {
      %c0_65 = arith.constant 0 : index
      %c0_66 = arith.constant 0 : index
      %c0_67 = arith.constant 0 : index
      %169 = vector.load %arg2[%c0_65, %c0_66, %c0_67] : memref<1x8x32xf32, #tpu.memory_space<vmem>>, vector<1x8x32xf32>
      %170 = vector.shape_cast %169 : vector<1x8x32xf32> to vector<8x32xf32>
      %c0_68 = arith.constant 0 : index
      %c0_69 = arith.constant 0 : index
      %171 = vector.load %arg4[%c0_68, %c0_69] : memref<2x32xf32, #tpu.memory_space<vmem>>, vector<1x32xf32>
      %c1_70 = arith.constant 1 : index
      %c0_71 = arith.constant 0 : index
      %172 = vector.load %arg4[%c1_70, %c0_71] : memref<2x32xf32, #tpu.memory_space<vmem>>, vector<1x32xf32>
      %cst_72 = arith.constant dense<0.000000e+00> : vector<8xf32>
      %173 = vector.multi_reduction <add>, %170, %cst_72 [1] : vector<8x32xf32> to vector<8xf32>
      %174 = vector.shape_cast %173 : vector<8xf32> to vector<8x1xf32>
      %cst_73 = arith.constant 3.200000e+01 : f32
      %175 = vector.broadcast %cst_73 : f32 to vector<8x1xf32>
      %176 = arith.divf %174, %175 : vector<8x1xf32>
      %177 = vector.broadcast %176 : vector<8x1xf32> to vector<8x32xf32>
      %178 = arith.subf %170, %177 : vector<8x32xf32>
      %179 = arith.mulf %178, %178 : vector<8x32xf32>
      %cst_74 = arith.constant dense<0.000000e+00> : vector<8xf32>
      %180 = vector.multi_reduction <add>, %179, %cst_74 [1] : vector<8x32xf32> to vector<8xf32>
      %181 = vector.shape_cast %180 : vector<8xf32> to vector<8x1xf32>
      %cst_75 = arith.constant 3.200000e+01 : f32
      %182 = vector.broadcast %cst_75 : f32 to vector<8x1xf32>
      %183 = arith.divf %181, %182 : vector<8x1xf32>
      %184 = vector.broadcast %176 : vector<8x1xf32> to vector<8x32xf32>
      %185 = arith.subf %170, %184 : vector<8x32xf32>
      %cst_76 = arith.constant 9.99999996E-13 : f32
      %186 = vector.broadcast %cst_76 : f32 to vector<8x1xf32>
      %187 = arith.addf %183, %186 : vector<8x1xf32>
      %188 = math.rsqrt %187 : vector<8x1xf32>
      %189 = vector.broadcast %188 : vector<8x1xf32> to vector<8x32xf32>
      %190 = arith.mulf %185, %189 : vector<8x32xf32>
      %191 = vector.broadcast %171 : vector<1x32xf32> to vector<8x32xf32>
      %192 = arith.mulf %190, %191 : vector<8x32xf32>
      %193 = vector.broadcast %172 : vector<1x32xf32> to vector<8x32xf32>
      %194 = arith.addf %192, %193 : vector<8x32xf32>
      %c0_77 = arith.constant 0 : index
      %c0_78 = arith.constant 0 : index
      %195 = vector.load %arg20[%c0_77, %c0_78] : memref<8x32xf32, #tpu.memory_space<vmem>>, vector<8x32xf32>
      tpu.vector_store %arg20[%c0_77, %c0_78], %194 {strides = array<i32>} : memref<8x32xf32, #tpu.memory_space<vmem>>, vector<8x32xf32>,
    } else {
    }
    %c0 = arith.constant 0 : index
    %c0_1 = arith.constant 0 : index
    %3 = vector.load %arg20[%c0, %c0_1] : memref<8x32xf32, #tpu.memory_space<vmem>>, vector<8x32xf32>
    %c0_2 = arith.constant 0 : index
    %c0_3 = arith.constant 0 : index
    %c0_4 = arith.constant 0 : index
    %4 = vector.load %arg5[%c0_2, %c0_3, %c0_4] : memref<1x32x96xbf16, #tpu.memory_space<vmem>>, vector<1x32x96xbf16>
    %5 = vector.shape_cast %4 : vector<1x32x96xbf16> to vector<32x96xbf16>
    %c0_5 = arith.constant 0 : index
    %c0_6 = arith.constant 0 : index
    %c0_7 = arith.constant 0 : index
    %6 = vector.load %arg6[%c0_5, %c0_6, %c0_7] : memref<1x1x96xf32, #tpu.memory_space<vmem>>, vector<1x1x96xf32>
    %7 = vector.shape_cast %6 : vector<1x1x96xf32> to vector<1x96xf32>
    %8 = arith.truncf %3 : vector<8x32xf32> to vector<8x32xbf16>
    %cst = arith.constant dense<0.000000e+00> : vector<8x96xf32>
    %9 = tpu.matmul %8, %5, %cst {dimension_numbers = #tpu.dot_dimension_numbers<[1], [0], [0], [1], [0, 0, 1, 1], [], []>} : vector<8x32xbf16>, vector<32x96xbf16>, vector<8x96xf32> -> vector<8x96xf32>
    %10 = vector.broadcast %7 : vector<1x96xf32> to vector<8x96xf32>
    %11 = arith.addf %9, %10 : vector<8x96xf32>
    %12 = vector.extract_strided_slice %11 {offsets = [0, 0], sizes = [8, 32], strides = [1, 1]} : vector<8x96xf32> to vector<8x32xf32>
    %cst_8 = arith.constant 0.353553385 : f32
    %13 = vector.broadcast %cst_8 : f32 to vector<8x32xf32>
    %14 = arith.mulf %12, %13 : vector<8x32xf32>
    %15 = vector.extract_strided_slice %11 {offsets = [0, 32], sizes = [8, 32], strides = [1, 1]} : vector<8x96xf32> to vector<8x32xf32>
    %16 = vector.extract_strided_slice %11 {offsets = [0, 64], sizes = [8, 32], strides = [1, 1]} : vector<8x96xf32> to vector<8x32xf32>
    %17 = vector.extract_strided_slice %14 {offsets = [0, 0], sizes = [8, 8], strides = [1, 1]} : vector<8x32xf32> to vector<8x8xf32>
    %18 = vector.extract_strided_slice %14 {offsets = [0, 8], sizes = [8, 8], strides = [1, 1]} : vector<8x32xf32> to vector<8x8xf32>
    %19 = vector.extract_strided_slice %14 {offsets = [0, 16], sizes = [8, 8], strides = [1, 1]} : vector<8x32xf32> to vector<8x8xf32>
    %20 = vector.extract_strided_slice %14 {offsets = [0, 24], sizes = [8, 8], strides = [1, 1]} : vector<8x32xf32> to vector<8x8xf32>
    %21 = vector.shape_cast %17 : vector<8x8xf32> to vector<1x8x8xf32>
    %22 = vector.shape_cast %18 : vector<8x8xf32> to vector<1x8x8xf32>
    %23 = vector.shape_cast %19 : vector<8x8xf32> to vector<1x8x8xf32>
    %24 = vector.shape_cast %20 : vector<8x8xf32> to vector<1x8x8xf32>
    %25 = tpu.concatenate %21, %22, %23, %24 in 0 : vector<1x8x8xf32>, vector<1x8x8xf32>, vector<1x8x8xf32>, vector<1x8x8xf32> -> vector<4x8x8xf32>
    %26 = arith.truncf %25 : vector<4x8x8xf32> to vector<4x8x8xbf16>
    %27 = vector.extract_strided_slice %15 {offsets = [0, 0], sizes = [8, 8], strides = [1, 1]} : vector<8x32xf32> to vector<8x8xf32>
    %28 = vector.extract_strided_slice %15 {offsets = [0, 8], sizes = [8, 8], strides = [1, 1]} : vector<8x32xf32> to vector<8x8xf32>
    %29 = vector.extract_strided_slice %15 {offsets = [0, 16], sizes = [8, 8], strides = [1, 1]} : vector<8x32xf32> to vector<8x8xf32>
    %30 = vector.extract_strided_slice %15 {offsets = [0, 24], sizes = [8, 8], strides = [1, 1]} : vector<8x32xf32> to vector<8x8xf32>
    %31 = vector.shape_cast %27 : vector<8x8xf32> to vector<1x8x8xf32>
    %32 = vector.shape_cast %28 : vector<8x8xf32> to vector<1x8x8xf32>
    %33 = vector.shape_cast %29 : vector<8x8xf32> to vector<1x8x8xf32>
    %34 = vector.shape_cast %30 : vector<8x8xf32> to vector<1x8x8xf32>
    %35 = tpu.concatenate %31, %32, %33, %34 in 0 : vector<1x8x8xf32>, vector<1x8x8xf32>, vector<1x8x8xf32>, vector<1x8x8xf32> -> vector<4x8x8xf32>
    %36 = arith.truncf %35 : vector<4x8x8xf32> to vector<4x8x8xbf16>
    %37 = vector.extract_strided_slice %16 {offsets = [0, 0], sizes = [8, 8], strides = [1, 1]} : vector<8x32xf32> to vector<8x8xf32>
    %38 = vector.extract_strided_slice %16 {offsets = [0, 8], sizes = [8, 8], strides = [1, 1]} : vector<8x32xf32> to vector<8x8xf32>
    %39 = vector.extract_strided_slice %16 {offsets = [0, 16], sizes = [8, 8], strides = [1, 1]} : vector<8x32xf32> to vector<8x8xf32>
    %40 = vector.extract_strided_slice %16 {offsets = [0, 24], sizes = [8, 8], strides = [1, 1]} : vector<8x32xf32> to vector<8x8xf32>
    %41 = vector.shape_cast %37 : vector<8x8xf32> to vector<1x8x8xf32>
    %42 = vector.shape_cast %38 : vector<8x8xf32> to vector<1x8x8xf32>
    %43 = vector.shape_cast %39 : vector<8x8xf32> to vector<1x8x8xf32>
    %44 = vector.shape_cast %40 : vector<8x8xf32> to vector<1x8x8xf32>
    %45 = tpu.concatenate %41, %42, %43, %44 in 0 : vector<1x8x8xf32>, vector<1x8x8xf32>, vector<1x8x8xf32>, vector<1x8x8xf32> -> vector<4x8x8xf32>
    %46 = arith.truncf %45 : vector<4x8x8xf32> to vector<4x8x8xbf16>
    %cst_9 = arith.constant dense<0.000000e+00> : vector<4x8x8xf32>
    %47 = tpu.matmul %26, %36, %cst_9 {dimension_numbers = #tpu.dot_dimension_numbers<[2], [2], [1], [1], [0, 0, 0, 1, 1, 1], [0], [0]>} : vector<4x8x8xbf16>, vector<4x8x8xbf16>, vector<4x8x8xf32> -> vector<4x8x8xf32>
    %c0_10 = arith.constant 0 : index
    %c0_11 = arith.constant 0 : index
    %c0_12 = arith.constant 0 : index
    %48 = vector.load %arg3[%c0_10, %c0_11, %c0_12] : memref<1x1x8xf32, #tpu.memory_space<vmem>>, vector<1x1x8xf32>
    %49 = vector.shape_cast %48 : vector<1x1x8xf32> to vector<1x8xf32>
    %50 = vector.shape_cast %49 : vector<1x8xf32> to vector<1x1x8xf32>
    %51 = vector.broadcast %50 : vector<1x1x8xf32> to vector<4x8x8xf32>
    %52 = arith.addf %47, %51 : vector<4x8x8xf32>
    %cst_13 = arith.constant dense<0xFF800000> : vector<4x8xf32>
    %53 = vector.multi_reduction <maximumf>, %52, %cst_13 [2] : vector<4x8x8xf32> to vector<4x8xf32>
    %54 = vector.shape_cast %53 : vector<4x8xf32> to vector<4x8x1xf32>
    %55 = vector.broadcast %54 : vector<4x8x1xf32> to vector<4x8x8xf32>
    %56 = arith.subf %52, %55 : vector<4x8x8xf32>
    %57 = math.exp %56 : vector<4x8x8xf32>
    %cst_14 = arith.constant dense<0.000000e+00> : vector<4x8xf32>
    %58 = vector.multi_reduction <add>, %57, %cst_14 [2] : vector<4x8x8xf32> to vector<4x8xf32>
    %59 = vector.shape_cast %58 : vector<4x8xf32> to vector<4x8x1xf32>
    %60 = tpu.reciprocal %59 {approx = true} : vector<4x8x1xf32> -> vector<4x8x1xf32>
    %61 = vector.broadcast %60 : vector<4x8x1xf32> to vector<4x8x8xf32>
    %62 = arith.mulf %57, %61 : vector<4x8x8xf32>
    %63 = arith.truncf %62 : vector<4x8x8xf32> to vector<4x8x8xbf16>
    %cst_15 = arith.constant dense<0.000000e+00> : vector<4x8x8xf32>
    %64 = tpu.matmul %63, %46, %cst_15 {dimension_numbers = #tpu.dot_dimension_numbers<[2], [1], [1], [2], [0, 0, 0, 1, 1, 2], [0], [0]>} : vector<4x8x8xbf16>, vector<4x8x8xbf16>, vector<4x8x8xf32> -> vector<4x8x8xf32>
    %65 = vector.extract_strided_slice %64 {offsets = [0, 0, 0], sizes = [1, 8, 8], strides = [1, 1, 1]} : vector<4x8x8xf32> to vector<1x8x8xf32>
    %66 = vector.shape_cast %65 : vector<1x8x8xf32> to vector<8x8xf32>
    %67 = vector.extract_strided_slice %64 {offsets = [1, 0, 0], sizes = [1, 8, 8], strides = [1, 1, 1]} : vector<4x8x8xf32> to vector<1x8x8xf32>
    %68 = vector.shape_cast %67 : vector<1x8x8xf32> to vector<8x8xf32>
    %69 = vector.extract_strided_slice %64 {offsets = [2, 0, 0], sizes = [1, 8, 8], strides = [1, 1, 1]} : vector<4x8x8xf32> to vector<1x8x8xf32>
    %70 = vector.shape_cast %69 : vector<1x8x8xf32> to vector<8x8xf32>
    %71 = vector.extract_strided_slice %64 {offsets = [3, 0, 0], sizes = [1, 8, 8], strides = [1, 1, 1]} : vector<4x8x8xf32> to vector<1x8x8xf32>
    %72 = vector.shape_cast %71 : vector<1x8x8xf32> to vector<8x8xf32>
    %73 = tpu.concatenate %66, %68, %70, %72 in 1 : vector<8x8xf32>, vector<8x8xf32>, vector<8x8xf32>, vector<8x8xf32> -> vector<8x32xf32>
    %c0_16 = arith.constant 0 : index
    %c0_17 = arith.constant 0 : index
    %c0_18 = arith.constant 0 : index
    %74 = vector.load %arg7[%c0_16, %c0_17, %c0_18] : memref<1x32x32xbf16, #tpu.memory_space<vmem>>, vector<1x32x32xbf16>
    %75 = vector.shape_cast %74 : vector<1x32x32xbf16> to vector<32x32xbf16>
    %c0_19 = arith.constant 0 : index
    %c0_20 = arith.constant 0 : index
    %c0_21 = arith.constant 0 : index
    %76 = vector.load %arg8[%c0_19, %c0_20, %c0_21] : memref<1x1x32xf32, #tpu.memory_space<vmem>>, vector<1x1x32xf32>
    %77 = vector.shape_cast %76 : vector<1x1x32xf32> to vector<1x32xf32>
    %78 = arith.truncf %73 : vector<8x32xf32> to vector<8x32xbf16>
    %cst_22 = arith.constant dense<0.000000e+00> : vector<8x32xf32>
    %79 = tpu.matmul %78, %75, %cst_22 {dimension_numbers = #tpu.dot_dimension_numbers<[1], [0], [0], [1], [0, 0, 1, 1], [], []>} : vector<8x32xbf16>, vector<32x32xbf16>, vector<8x32xf32> -> vector<8x32xf32>
    %80 = vector.broadcast %77 : vector<1x32xf32> to vector<8x32xf32>
    %81 = arith.addf %79, %80 : vector<8x32xf32>
    %82 = arith.addf %81, %3 : vector<8x32xf32>
    %c0_23 = arith.constant 0 : index
    %c0_24 = arith.constant 0 : index
    %c0_25 = arith.constant 0 : index
    %83 = vector.load %arg9[%c0_23, %c0_24, %c0_25] : memref<1x2x32xf32, #tpu.memory_space<vmem>>, vector<1x1x32xf32>
    %84 = vector.shape_cast %83 : vector<1x1x32xf32> to vector<1x32xf32>
    %c0_26 = arith.constant 0 : index
    %c1 = arith.constant 1 : index
    %c0_27 = arith.constant 0 : index
    %85 = vector.load %arg9[%c0_26, %c1, %c0_27] : memref<1x2x32xf32, #tpu.memory_space<vmem>>, vector<1x1x32xf32>
    %86 = vector.shape_cast %85 : vector<1x1x32xf32> to vector<1x32xf32>
    %cst_28 = arith.constant dense<0.000000e+00> : vector<8xf32>
    %87 = vector.multi_reduction <add>, %82, %cst_28 [1] : vector<8x32xf32> to vector<8xf32>
    %88 = vector.shape_cast %87 : vector<8xf32> to vector<8x1xf32>
    %cst_29 = arith.constant 3.200000e+01 : f32
    %89 = vector.broadcast %cst_29 : f32 to vector<8x1xf32>
    %90 = arith.divf %88, %89 : vector<8x1xf32>
    %91 = vector.broadcast %90 : vector<8x1xf32> to vector<8x32xf32>
    %92 = arith.subf %82, %91 : vector<8x32xf32>
    %93 = arith.mulf %92, %92 : vector<8x32xf32>
    %cst_30 = arith.constant dense<0.000000e+00> : vector<8xf32>
    %94 = vector.multi_reduction <add>, %93, %cst_30 [1] : vector<8x32xf32> to vector<8xf32>
    %95 = vector.shape_cast %94 : vector<8xf32> to vector<8x1xf32>
    %cst_31 = arith.constant 3.200000e+01 : f32
    %96 = vector.broadcast %cst_31 : f32 to vector<8x1xf32>
    %97 = arith.divf %95, %96 : vector<8x1xf32>
    %98 = vector.broadcast %90 : vector<8x1xf32> to vector<8x32xf32>
    %99 = arith.subf %82, %98 : vector<8x32xf32>
    %cst_32 = arith.constant 9.99999996E-13 : f32
    %100 = vector.broadcast %cst_32 : f32 to vector<8x1xf32>
    %101 = arith.addf %97, %100 : vector<8x1xf32>
    %102 = math.rsqrt %101 : vector<8x1xf32>
    %103 = vector.broadcast %102 : vector<8x1xf32> to vector<8x32xf32>
    %104 = arith.mulf %99, %103 : vector<8x32xf32>
    %105 = vector.broadcast %84 : vector<1x32xf32> to vector<8x32xf32>
    %106 = arith.mulf %104, %105 : vector<8x32xf32>
    %107 = vector.broadcast %86 : vector<1x32xf32> to vector<8x32xf32>
    %108 = arith.addf %106, %107 : vector<8x32xf32>
    %c0_33 = arith.constant 0 : index
    %c0_34 = arith.constant 0 : index
    %c0_35 = arith.constant 0 : index
    %109 = vector.load %arg10[%c0_33, %c0_34, %c0_35] : memref<1x32x64xbf16, #tpu.memory_space<vmem>>, vector<1x32x64xbf16>
    %110 = vector.shape_cast %109 : vector<1x32x64xbf16> to vector<32x64xbf16>
    %c0_36 = arith.constant 0 : index
    %c0_37 = arith.constant 0 : index
    %c0_38 = arith.constant 0 : index
    %111 = vector.load %arg11[%c0_36, %c0_37, %c0_38] : memref<1x1x64xf32, #tpu.memory_space<vmem>>, vector<1x1x64xf32>
    %112 = vector.shape_cast %111 : vector<1x1x64xf32> to vector<1x64xf32>
    %113 = arith.truncf %108 : vector<8x32xf32> to vector<8x32xbf16>
    %cst_39 = arith.constant dense<0.000000e+00> : vector<8x64xf32>
    %114 = tpu.matmul %113, %110, %cst_39 {dimension_numbers = #tpu.dot_dimension_numbers<[1], [0], [0], [1], [0, 0, 1, 1], [], []>} : vector<8x32xbf16>, vector<32x64xbf16>, vector<8x64xf32> -> vector<8x64xf32>
    %115 = vector.broadcast %112 : vector<1x64xf32> to vector<8x64xf32>
    %116 = arith.addf %114, %115 : vector<8x64xf32>
    %cst_40 = arith.constant 5.000000e-01 : f32
    %117 = vector.broadcast %cst_40 : f32 to vector<8x64xf32>
    %118 = arith.mulf %117, %116 : vector<8x64xf32>
    %cst_41 = arith.constant 4.471500e-02 : f32
    %119 = vector.broadcast %cst_41 : f32 to vector<8x64xf32>
    %120 = arith.mulf %119, %116 : vector<8x64xf32>
    %121 = arith.mulf %120, %116 : vector<8x64xf32>
    %122 = arith.mulf %121, %116 : vector<8x64xf32>
    %123 = arith.addf %116, %122 : vector<8x64xf32>
    %cst_42 = arith.constant 0.797884583 : f32
    %124 = vector.broadcast %cst_42 : f32 to vector<8x64xf32>
    %125 = arith.mulf %124, %123 : vector<8x64xf32>
    %126 = math.tanh %125 : vector<8x64xf32>
    %cst_43 = arith.constant 1.000000e+00 : f32
    %127 = vector.broadcast %cst_43 : f32 to vector<8x64xf32>
    %128 = arith.addf %127, %126 : vector<8x64xf32>
    %129 = arith.mulf %118, %128 : vector<8x64xf32>
    %c0_44 = arith.constant 0 : index
    %c0_45 = arith.constant 0 : index
    %c0_46 = arith.constant 0 : index
    %130 = vector.load %arg12[%c0_44, %c0_45, %c0_46] : memref<1x64x32xbf16, #tpu.memory_space<vmem>>, vector<1x64x32xbf16>
    %131 = vector.shape_cast %130 : vector<1x64x32xbf16> to vector<64x32xbf16>
    %c0_47 = arith.constant 0 : index
    %c0_48 = arith.constant 0 : index
    %c0_49 = arith.constant 0 : index
    %132 = vector.load %arg13[%c0_47, %c0_48, %c0_49] : memref<1x1x32xf32, #tpu.memory_space<vmem>>, vector<1x1x32xf32>
    %133 = vector.shape_cast %132 : vector<1x1x32xf32> to vector<1x32xf32>
    %134 = arith.truncf %129 : vector<8x64xf32> to vector<8x64xbf16>
    %cst_50 = arith.constant dense<0.000000e+00> : vector<8x32xf32>
    %135 = tpu.matmul %134, %131, %cst_50 {dimension_numbers = #tpu.dot_dimension_numbers<[1], [0], [0], [1], [0, 0, 1, 1], [], []>} : vector<8x64xbf16>, vector<64x32xbf16>, vector<8x32xf32> -> vector<8x32xf32>
    %136 = vector.broadcast %133 : vector<1x32xf32> to vector<8x32xf32>
    %137 = arith.addf %135, %136 : vector<8x32xf32>
    %138 = arith.addf %137, %108 : vector<8x32xf32>
    %c0_51 = arith.constant 0 : index
    %c0_52 = arith.constant 0 : index
    %c0_53 = arith.constant 0 : index
    %139 = vector.load %arg14[%c0_51, %c0_52, %c0_53] : memref<1x2x32xf32, #tpu.memory_space<vmem>>, vector<1x1x32xf32>
    %140 = vector.shape_cast %139 : vector<1x1x32xf32> to vector<1x32xf32>
    %c0_54 = arith.constant 0 : index
    %c1_55 = arith.constant 1 : index
    %c0_56 = arith.constant 0 : index
    %141 = vector.load %arg14[%c0_54, %c1_55, %c0_56] : memref<1x2x32xf32, #tpu.memory_space<vmem>>, vector<1x1x32xf32>
    %142 = vector.shape_cast %141 : vector<1x1x32xf32> to vector<1x32xf32>
    %cst_57 = arith.constant dense<0.000000e+00> : vector<8xf32>
    %143 = vector.multi_reduction <add>, %138, %cst_57 [1] : vector<8x32xf32> to vector<8xf32>
    %144 = vector.shape_cast %143 : vector<8xf32> to vector<8x1xf32>
    %cst_58 = arith.constant 3.200000e+01 : f32
    %145 = vector.broadcast %cst_58 : f32 to vector<8x1xf32>
    %146 = arith.divf %144, %145 : vector<8x1xf32>
    %147 = vector.broadcast %146 : vector<8x1xf32> to vector<8x32xf32>
    %148 = arith.subf %138, %147 : vector<8x32xf32>
    %149 = arith.mulf %148, %148 : vector<8x32xf32>
    %cst_59 = arith.constant dense<0.000000e+00> : vector<8xf32>
    %150 = vector.multi_reduction <add>, %149, %cst_59 [1] : vector<8x32xf32> to vector<8xf32>
    %151 = vector.shape_cast %150 : vector<8xf32> to vector<8x1xf32>
    %cst_60 = arith.constant 3.200000e+01 : f32
    %152 = vector.broadcast %cst_60 : f32 to vector<8x1xf32>
    %153 = arith.divf %151, %152 : vector<8x1xf32>
    %154 = vector.broadcast %146 : vector<8x1xf32> to vector<8x32xf32>
    %155 = arith.subf %138, %154 : vector<8x32xf32>
    %cst_61 = arith.constant 9.99999996E-13 : f32
    %156 = vector.broadcast %cst_61 : f32 to vector<8x1xf32>
    %157 = arith.addf %153, %156 : vector<8x1xf32>
    %158 = math.rsqrt %157 : vector<8x1xf32>
    %159 = vector.broadcast %158 : vector<8x1xf32> to vector<8x32xf32>
    %160 = arith.mulf %155, %159 : vector<8x32xf32>
    %161 = vector.broadcast %140 : vector<1x32xf32> to vector<8x32xf32>
    %162 = arith.mulf %160, %161 : vector<8x32xf32>
    %163 = vector.broadcast %142 : vector<1x32xf32> to vector<8x32xf32>
    %164 = arith.addf %162, %163 : vector<8x32xf32>
    %c0_62 = arith.constant 0 : index
    %c0_63 = arith.constant 0 : index
    %165 = vector.load %arg20[%c0_62, %c0_63] : memref<8x32xf32, #tpu.memory_space<vmem>>, vector<8x32xf32>
    tpu.vector_store %arg20[%c0_62, %c0_63], %164 {strides = array<i32>} : memref<8x32xf32, #tpu.memory_space<vmem>>, vector<8x32xf32>,
    %c1_i32 = arith.constant 1 : i32
    %166 = arith.cmpi eq, %arg1, %c1_i32 : i32
    %167 = arith.extui %166 : i1 to i32
    %c0_i32_64 = arith.constant 0 : i32
    %168 = arith.cmpi ne, %167, %c0_i32_64 : i32
    scf.if %168 {
      %169 = vector.extract_strided_slice %164 {offsets = [0, 0], sizes = [1, 32], strides = [1, 1]} : vector<8x32xf32> to vector<1x32xf32>
      %c0_65 = arith.constant 0 : index
      %c0_66 = arith.constant 0 : index
      %170 = vector.load %arg15[%c0_65, %c0_66] : memref<32x32xbf16, #tpu.memory_space<vmem>>, vector<32x32xbf16>
      %c0_67 = arith.constant 0 : index
      %c0_68 = arith.constant 0 : index
      %171 = vector.load %arg16[%c0_67, %c0_68] : memref<1x32xf32, #tpu.memory_space<vmem>>, vector<1x32xf32>
      %172 = arith.truncf %169 : vector<1x32xf32> to vector<1x32xbf16>
      %cst_69 = arith.constant dense<0.000000e+00> : vector<1x32xf32>
      %173 = tpu.matmul %172, %170, %cst_69 {dimension_numbers = #tpu.dot_dimension_numbers<[1], [0], [0], [1], [0, 0, 1, 1], [], []>} : vector<1x32xbf16>, vector<32x32xbf16>, vector<1x32xf32> -> vector<1x32xf32>
      %174 = arith.addf %173, %171 : vector<1x32xf32>
      %175 = math.tanh %174 : vector<1x32xf32>
      %c0_70 = arith.constant 0 : index
      %c0_71 = arith.constant 0 : index
      %176 = vector.load %arg17[%c0_70, %c0_71] : memref<32x128xbf16, #tpu.memory_space<vmem>>, vector<32x128xbf16>
      %c0_72 = arith.constant 0 : index
      %c0_73 = arith.constant 0 : index
      %177 = vector.load %arg18[%c0_72, %c0_73] : memref<1x128xf32, #tpu.memory_space<vmem>>, vector<1x128xf32>
      %178 = arith.truncf %175 : vector<1x32xf32> to vector<1x32xbf16>
      %cst_74 = arith.constant dense<0.000000e+00> : vector<1x128xf32>
      %179 = tpu.matmul %178, %176, %cst_74 {dimension_numbers = #tpu.dot_dimension_numbers<[1], [0], [0], [1], [0, 0, 1, 1], [], []>} : vector<1x32xbf16>, vector<32x128xbf16>, vector<1x128xf32> -> vector<1x128xf32>
      %180 = arith.addf %179, %177 : vector<1x128xf32>
      %c0_75 = arith.constant 0 : index
      %c0_76 = arith.constant 0 : index
      %c0_77 = arith.constant 0 : index
      %181 = vector.load %arg19[%c0_75, %c0_76, %c0_77] : memref<1x1x128xf32, #tpu.memory_space<vmem>>, vector<1x1x128xf32>
      %182 = vector.shape_cast %181 : vector<1x1x128xf32> to vector<1x128xf32>
      %183 = vector.shape_cast %180 : vector<1x128xf32> to vector<1x1x128xf32>
      tpu.vector_store %arg19[%c0_75, %c0_76, %c0_77], %183 {strides = array<i32>} : memref<1x1x128xf32, #tpu.memory_space<vmem>>, vector<1x1x128xf32>,
    } else {
    }
    return
  }
  func.func @transform_0(%arg0: i32, %arg1: i32) -> (i32, i32, i32) {
    %c0_i32 = arith.constant 0 : i32
    %c0_i32_0 = arith.constant 0 : i32
    %c0_i32_1 = arith.constant 0 : i32
    return %arg0, %c0_i32, %c0_i32_0 : i32, i32, i32
  }
  func.func @transform_1(%arg0: i32, %arg1: i32) -> (i32, i32, i32) {
    %c0_i32 = arith.constant 0 : i32
    %c0_i32_0 = arith.constant 0 : i32
    %c0_i32_1 = arith.constant 0 : i32
    return %arg0, %c0_i32, %c0_i32_0 : i32, i32, i32
  }
  func.func @transform_2(%arg0: i32, %arg1: i32) -> (i32, i32) {
    %c0_i32 = arith.constant 0 : i32
    %c0_i32_0 = arith.constant 0 : i32
    %c0_i32_1 = arith.constant 0 : i32
    return %c0_i32, %c0_i32_0 : i32, i32
  }
  func.func @transform_3(%arg0: i32, %arg1: i32) -> (i32, i32, i32) {
    %c0_i32 = arith.constant 0 : i32
    %c0_i32_0 = arith.constant 0 : i32
    %c0_i32_1 = arith.constant 0 : i32
    return %arg1, %c0_i32, %c0_i32_0 : i32, i32, i32
  }
  func.func @transform_4(%arg0: i32, %arg1: i32) -> (i32, i32, i32) {
    %c0_i32 = arith.constant 0 : i32
    %c0_i32_0 = arith.constant 0 : i32
    %c0_i32_1 = arith.constant 0 : i32
    return %arg1, %c0_i32, %c0_i32_0 : i32, i32, i32
  }
  func.func @transform_5(%arg0: i32, %arg1: i32) -> (i32, i32, i32) {
    %c0_i32 = arith.constant 0 : i32
    %c0_i32_0 = arith.constant 0 : i32
    %c0_i32_1 = arith.constant 0 : i32
    return %arg1, %c0_i32, %c0_i32_0 : i32, i32, i32
  }
  func.func @transform_6(%arg0: i32, %arg1: i32) -> (i32, i32, i32) {
    %c0_i32 = arith.constant 0 : i32
    %c0_i32_0 = arith.constant 0 : i32
    %c0_i32_1 = arith.constant 0 : i32
    return %arg1, %c0_i32, %c0_i32_0 : i32, i32, i32
  }
  func.func @transform_7(%arg0: i32, %arg1: i32) -> (i32, i32, i32) {
    %c0_i32 = arith.constant 0 : i32
    %c0_i32_0 = arith.constant 0 : i32
    %c0_i32_1 = arith.constant 0 : i32
    return %arg1, %c0_i32, %c0_i32_0 : i32, i32, i32
  }
  func.func @transform_8(%arg0: i32, %arg1: i32) -> (i32, i32, i32) {
    %c0_i32 = arith.constant 0 : i32
    %c0_i32_0 = arith.constant 0 : i32
    %c0_i32_1 = arith.constant 0 : i32
    return %arg1, %c0_i32, %c0_i32_0 : i32, i32, i32
  }
  func.func @transform_9(%arg0: i32, %arg1: i32) -> (i32, i32, i32) {
    %c0_i32 = arith.constant 0 : i32
    %c0_i32_0 = arith.constant 0 : i32
    %c0_i32_1 = arith.constant 0 : i32
    return %arg1, %c0_i32, %c0_i32_0 : i32, i32, i32
  }
  func.func @transform_10(%arg0: i32, %arg1: i32) -> (i32, i32, i32) {
    %c0_i32 = arith.constant 0 : i32
    %c0_i32_0 = arith.constant 0 : i32
    %c0_i32_1 = arith.constant 0 : i32
    return %arg1, %c0_i32, %c0_i32_0 : i32, i32, i32
  }
  func.func @transform_11(%arg0: i32, %arg1: i32) -> (i32, i32, i32) {
    %c0_i32 = arith.constant 0 : i32
    %c0_i32_0 = arith.constant 0 : i32
    %c0_i32_1 = arith.constant 0 : i32
    return %arg1, %c0_i32, %c0_i32_0 : i32, i32, i32
  }
  func.func @transform_12(%arg0: i32, %arg1: i32) -> (i32, i32, i32) {
    %c0_i32 = arith.constant 0 : i32
    %c0_i32_0 = arith.constant 0 : i32
    %c0_i32_1 = arith.constant 0 : i32
    return %arg1, %c0_i32, %c0_i32_0 : i32, i32, i32
  }
  func.func @transform_13(%arg0: i32, %arg1: i32) -> (i32, i32) {
    %c0_i32 = arith.constant 0 : i32
    %c0_i32_0 = arith.constant 0 : i32
    %c0_i32_1 = arith.constant 0 : i32
    return %c0_i32, %c0_i32_0 : i32, i32
  }
  func.func @transform_14(%arg0: i32, %arg1: i32) -> (i32, i32) {
    %c0_i32 = arith.constant 0 : i32
    %c0_i32_0 = arith.constant 0 : i32
    %c0_i32_1 = arith.constant 0 : i32
    return %c0_i32, %c0_i32_0 : i32, i32
  }
  func.func @transform_15(%arg0: i32, %arg1: i32) -> (i32, i32) {
    %c0_i32 = arith.constant 0 : i32
    %c0_i32_0 = arith.constant 0 : i32
    %c0_i32_1 = arith.constant 0 : i32
    return %c0_i32, %c0_i32_0 : i32, i32
  }
  func.func @transform_16(%arg0: i32, %arg1: i32) -> (i32, i32) {
    %c0_i32 = arith.constant 0 : i32
    %c0_i32_0 = arith.constant 0 : i32
    %c0_i32_1 = arith.constant 0 : i32
    return %c0_i32, %c0_i32_0 : i32, i32
  }
  func.func @transform_17(%arg0: i32, %arg1: i32) -> (i32, i32, i32) {
    %c0_i32 = arith.constant 0 : i32
    %c0_i32_0 = arith.constant 0 : i32
    %c0_i32_1 = arith.constant 0 : i32
    return %arg0, %c0_i32, %c0_i32_0 : i32, i32, i32
  }
}

</mosaic_0001>

<llo_original>
// kernel: custom_bert_classifier.1
$region0: #{custom_bert_classifier.1}
  #allocation0 [shape = 'u32[]', space=smem, size = 0x4, offset = 0x4, fixed_abs, tag = 'smem constant byte address 0x4 - core index']
  #allocation1 [shape = 'u32[144,128]{1,0:T(1,128)}', space=vmem, size = 0x12000, scoped, tag = 'internal scratch']
  #allocation2 [shape = 'f32[8,32]{1,0:T(8,128)}', space=vmem, size = 0x1000, scoped, tag = 'scratch operand']
  %s0 = inlined_call_operand.vmem [shape: f32[2,8,32], index: 0, kind: input, shape index: {}]
  %s1 = inlined_call_operand.vmem [shape: f32[2,1,8], index: 1, kind: input, shape index: {}]
  %s2 = inlined_call_operand.vmem [shape: f32[2,32], index: 2, kind: input, shape index: {}]
  %s3 = inlined_call_operand.vmem [shape: bf16[2,32,96], index: 3, kind: input, shape index: {}]
  %s4 = inlined_call_operand.vmem [shape: f32[2,1,96], index: 4, kind: input, shape index: {}]
  %s5 = inlined_call_operand.vmem [shape: bf16[2,32,32], index: 5, kind: input, shape index: {}]
  %s6 = inlined_call_operand.vmem [shape: f32[2,1,32], index: 6, kind: input, shape index: {}]
  %s7 = inlined_call_operand.vmem [shape: f32[2,2,32], index: 7, kind: input, shape index: {}]
  %s8 = inlined_call_operand.vmem [shape: bf16[2,32,64], index: 8, kind: input, shape index: {}]
  %s9 = inlined_call_operand.vmem [shape: f32[2,1,64], index: 9, kind: input, shape index: {}]
  %s10 = inlined_call_operand.vmem [shape: bf16[2,64,32], index: 10, kind: input, shape index: {}]
  %s11 = inlined_call_operand.vmem [shape: f32[2,1,32], index: 11, kind: input, shape index: {}]
  %s12 = inlined_call_operand.vmem [shape: f32[2,2,32], index: 12, kind: input, shape index: {}]
  %s13 = inlined_call_operand.vmem [shape: bf16[32,32], index: 13, kind: input, shape index: {}]
  %s14 = inlined_call_operand.vmem [shape: f32[1,32], index: 14, kind: input, shape index: {}]
  %s15 = inlined_call_operand.vmem [shape: bf16[32,128], index: 15, kind: input, shape index: {}]
  %s16 = inlined_call_operand.vmem [shape: f32[1,128], index: 16, kind: input, shape index: {}]
  %s17 = inlined_call_operand.hbm [shape: f32[2,1,128], index: 17, kind: output, shape index: {}]
  %s18 = sld [smem:[#allocation0]]
  $region109: #{custom_bert_classifier.1} parent=0
    _
  %s20 = ssub.s32 1, %s18
  %s21 = scalar_select 0, %s20, %s18
  $region1: #{custom_bert_classifier.1} parent=0
    #allocation3 [shape = 'u8[1024]{0}', space=vmem, size = 0x400, scoped, tag = 'output window, operand 0']
    #allocation4 [shape = 's32[2]{0}', space=sflag, size = 0x8, scoped, tag = 'scoped memory for custom_bert_classifier.1']
    %22 = vsyncpa [#allocation4], 0
    %s23 = scalar_lea.sflag [#allocation4], 1
    %24 = vsyncpa %s23, 0
    loop: start=0, step=1, limit=6
    $region2: #{custom_bert_classifier.1} parent=1 // loop_pre_header
      _
    $region3: #{custom_bert_classifier.1} parent=1 // loop_header
      %s26 = sphi 0, %s30
      %p27 = scmp.ge.s32.totalorder %s26, 6
      %s33 = sphi 0, %s45
      %s34 = sphi 0, %s41
      %s35 = sphi 0, %s33
      %s36 = sphi 0, %s34
      %s37 = sphi 0, %s35
      %s38 = sphi 0, %s36
      %s48 = sphi 0, %s50
      %s51 = sphi 0, %s48
      %s52 = sphi 0, %s51
      %s68 = sphi 0, %s52
      %s74 = sphi 0, %s76
      %s77 = sphi 0, %s74
      %s78 = sphi 0, %s77
      %s94 = sphi 0, %s78
      %s98 = sphi 0, %s98
      %s100 = sphi 0, %s98
      %s101 = sphi 0, %s100
      %s115 = sphi 0, %s101
      %s121 = sphi 0, %s123
      %s124 = sphi 0, %s121
      %s125 = sphi 0, %s124
      %s141 = sphi 0, %s125
      %s147 = sphi 0, %s149
      %s150 = sphi 0, %s147
      %s151 = sphi 0, %s150
      %s167 = sphi 0, %s151
      %s173 = sphi 0, %s175
      %s176 = sphi 0, %s173
      %s177 = sphi 0, %s176
      %s193 = sphi 0, %s177
      %s199 = sphi 0, %s201
      %s202 = sphi 0, %s199
      %s203 = sphi 0, %s202
      %s219 = sphi 0, %s203
      %s225 = sphi 0, %s227
      %s228 = sphi 0, %s225
      %s229 = sphi 0, %s228
      %s245 = sphi 0, %s229
      %s251 = sphi 0, %s253
      %s254 = sphi 0, %s251
      %s255 = sphi 0, %s254
      %s271 = sphi 0, %s255
      %s277 = sphi 0, %s279
      %s280 = sphi 0, %s277
      %s281 = sphi 0, %s280
      %s297 = sphi 0, %s281
      %s303 = sphi 0, %s305
      %s306 = sphi 0, %s303
      %s307 = sphi 0, %s306
      %s323 = sphi 0, %s307
      %s329 = sphi 0, %s331
      %s332 = sphi 0, %s329
      %s333 = sphi 0, %s332
      %s349 = sphi 0, %s333
      %s355 = sphi 0, %s357
      %s358 = sphi 0, %s355
      %s359 = sphi 0, %s358
      %s375 = sphi 0, %s359
      %s379 = sphi 0, %s379
      %s381 = sphi 0, %s379
      %s382 = sphi 0, %s381
      %s396 = sphi 0, %s382
      %s400 = sphi 0, %s400
      %s402 = sphi 0, %s400
      %s403 = sphi 0, %s402
      %s417 = sphi 0, %s403
      %s421 = sphi 0, %s421
      %s423 = sphi 0, %s421
      %s424 = sphi 0, %s423
      %s438 = sphi 0, %s424
      %s442 = sphi 0, %s442
      %s444 = sphi 0, %s442
      %s445 = sphi 0, %s444
      %s459 = sphi 0, %s445
      %s465 = sphi 0, %s467
      %s468 = sphi 0, %s465
      %s469 = sphi 0, %s468
      %s485 = sphi 0, %s469
    $region4: #{custom_bert_classifier.1} parent=1 // loop_header_branch
      %29 = sbr.rel (%p27) target = $region8
    $region5: #{custom_bert_classifier.1} parent=1 // loop_body
      %s31 = ssub.s32 %s26, 1
      %s32 = ssub.s32 %s26, 2
      %s39 = sadd.s32 1, %s34
      %p40 = scmp.ge.s32.totalorder %s39, 2
      %s41 = scalar_select %p40, 0, %s39
      %s42 = sadd.s32 1, %s33
      %s43 = scalar_select %p40, %s42, %s33
      %p44 = scmp.ge.s32.totalorder %s43, 2
      %s45 = scalar_select %p44, 0, %s43
      %s46 = ssub.s32 %s33, %s45
      %p47 = scmp.eq.s32.totalorder %s46, 0
      %s49 = sadd.s32 %s48, 1
      %s50 = scalar_select %p47, %s48, %s49
      %p53 = pneg %p47
      %p54 = scmp.eq.s32.totalorder %s26, 3
      %p55 = por %p53, %p54
      %p56 = scmp.ne.s32.totalorder %s48, %s51
      %p57 = scmp.eq.s32.totalorder %s26, 0
      %p58 = por %p56, %p57
      %p59 = scmp.ne.s32.totalorder %s48, %s51
      %p60 = scmp.eq.s32.totalorder %s31, 3
      %p61 = por %p59, %p60
      %p62 = scmp.ne.s32.totalorder %s51, %s52
      %p63 = scmp.eq.s32.totalorder %s31, 0
      %p64 = por %p62, %p63
      %p65 = scmp.ne.s32.totalorder %s51, %s52
      %p66 = scmp.eq.s32.totalorder %s32, 3
      %p67 = por %p65, %p66
      %p69 = scmp.ne.s32.totalorder %s52, %s68
      %p70 = scmp.eq.s32.totalorder %s32, 0
      %p71 = por %p69, %p70
      %s72 = ssub.s32 %s33, %s45
      %p73 = scmp.eq.s32.totalorder %s72, 0
      %s75 = sadd.s32 %s74, 1
      %s76 = scalar_select %p73, %s74, %s75
      %p79 = pneg %p73
      %p80 = scmp.eq.s32.totalorder %s26, 3
      %p81 = por %p79, %p80
      %p82 = scmp.ne.s32.totalorder %s74, %s77
      %p83 = scmp.eq.s32.totalorder %s26, 0
      %p84 = por %p82, %p83
      %p85 = scmp.ne.s32.totalorder %s74, %s77
      %p86 = scmp.eq.s32.totalorder %s31, 3
      %p87 = por %p85, %p86
      %p88 = scmp.ne.s32.totalorder %s77, %s78
      %p89 = scmp.eq.s32.totalorder %s31, 0
      %p90 = por %p88, %p89
      %p91 = scmp.ne.s32.totalorder %s77, %s78
      %p92 = scmp.eq.s32.totalorder %s32, 3
      %p93 = por %p91, %p92
      %p95 = scmp.ne.s32.totalorder %s78, %s94
      %p96 = scmp.eq.s32.totalorder %s32, 0
      %p97 = por %p95, %p96
      %s99 = sadd.s32 %s98, 1
      %p102 = scmp.eq.s32.totalorder %s26, 3
      %p103 = scmp.ne.s32.totalorder %s98, %s100
      %p104 = scmp.eq.s32.totalorder %s26, 0
      %p105 = por %p103, %p104
      %p106 = scmp.ne.s32.totalorder %s98, %s100
      %p107 = scmp.eq.s32.totalorder %s31, 3
      %p108 = por %p106, %p107
      %p109 = scmp.ne.s32.totalorder %s100, %s101
      %p110 = scmp.eq.s32.totalorder %s31, 0
      %p111 = por %p109, %p110
      %p112 = scmp.ne.s32.totalorder %s100, %s101
      %p113 = scmp.eq.s32.totalorder %s32, 3
      %p114 = por %p112, %p113
      %p116 = scmp.ne.s32.totalorder %s101, %s115
      %p117 = scmp.eq.s32.totalorder %s32, 0
      %p118 = por %p116, %p117
      %s119 = ssub.s32 %s34, %s41
      %p120 = scmp.eq.s32.totalorder %s119, 0
      %s122 = sadd.s32 %s121, 1
      %s123 = scalar_select %p120, %s121, %s122
      %p126 = pneg %p120
      %p127 = scmp.eq.s32.totalorder %s26, 3
      %p128 = por %p126, %p127
      %p129 = scmp.ne.s32.totalorder %s121, %s124
      %p130 = scmp.eq.s32.totalorder %s26, 0
      %p131 = por %p129, %p130
      %p132 = scmp.ne.s32.totalorder %s121, %s124
      %p133 = scmp.eq.s32.totalorder %s31, 3
      %p134 = por %p132, %p133
      %p135 = scmp.ne.s32.totalorder %s124, %s125
      %p136 = scmp.eq.s32.totalorder %s31, 0
      %p137 = por %p135, %p136
      %p138 = scmp.ne.s32.totalorder %s124, %s125
      %p139 = scmp.eq.s32.totalorder %s32, 3
      %p140 = por %p138, %p139
      %p142 = scmp.ne.s32.totalorder %s125, %s141
      %p143 = scmp.eq.s32.totalorder %s32, 0
      %p144 = por %p142, %p143
      %s145 = ssub.s32 %s34, %s41
      %p146 = scmp.eq.s32.totalorder %s145, 0
      %s148 = sadd.s32 %s147, 1
      %s149 = scalar_select %p146, %s147, %s148
      %p152 = pneg %p146
      %p153 = scmp.eq.s32.totalorder %s26, 3
      %p154 = por %p152, %p153
      %p155 = scmp.ne.s32.totalorder %s147, %s150
      %p156 = scmp.eq.s32.totalorder %s26, 0
      %p157 = por %p155, %p156
      %p158 = scmp.ne.s32.totalorder %s147, %s150
      %p159 = scmp.eq.s32.totalorder %s31, 3
      %p160 = por %p158, %p159
      %p161 = scmp.ne.s32.totalorder %s150, %s151
      %p162 = scmp.eq.s32.totalorder %s31, 0
      %p163 = por %p161, %p162
      %p164 = scmp.ne.s32.totalorder %s150, %s151
      %p165 = scmp.eq.s32.totalorder %s32, 3
      %p166 = por %p164, %p165
      %p168 = scmp.ne.s32.totalorder %s151, %s167
      %p169 = scmp.eq.s32.totalorder %s32, 0
      %p170 = por %p168, %p169
      %s171 = ssub.s32 %s34, %s41
      %p172 = scmp.eq.s32.totalorder %s171, 0
      %s174 = sadd.s32 %s173, 1
      %s175 = scalar_select %p172, %s173, %s174
      %p178 = pneg %p172
      %p179 = scmp.eq.s32.totalorder %s26, 3
      %p180 = por %p178, %p179
      %p181 = scmp.ne.s32.totalorder %s173, %s176
      %p182 = scmp.eq.s32.totalorder %s26, 0
      %p183 = por %p181, %p182
      %p184 = scmp.ne.s32.totalorder %s173, %s176
      %p185 = scmp.eq.s32.totalorder %s31, 3
      %p186 = por %p184, %p185
      %p187 = scmp.ne.s32.totalorder %s176, %s177
      %p188 = scmp.eq.s32.totalorder %s31, 0
      %p189 = por %p187, %p188
      %p190 = scmp.ne.s32.totalorder %s176, %s177
      %p191 = scmp.eq.s32.totalorder %s32, 3
      %p192 = por %p190, %p191
      %p194 = scmp.ne.s32.totalorder %s177, %s193
      %p195 = scmp.eq.s32.totalorder %s32, 0
      %p196 = por %p194, %p195
      %s197 = ssub.s32 %s34, %s41
      %p198 = scmp.eq.s32.totalorder %s197, 0
      %s200 = sadd.s32 %s199, 1
      %s201 = scalar_select %p198, %s199, %s200
      %p204 = pneg %p198
      %p205 = scmp.eq.s32.totalorder %s26, 3
      %p206 = por %p204, %p205
      %p207 = scmp.ne.s32.totalorder %s199, %s202
      %p208 = scmp.eq.s32.totalorder %s26, 0
      %p209 = por %p207, %p208
      %p210 = scmp.ne.s32.totalorder %s199, %s202
      %p211 = scmp.eq.s32.totalorder %s31, 3
      %p212 = por %p210, %p211
      %p213 = scmp.ne.s32.totalorder %s202, %s203
      %p214 = scmp.eq.s32.totalorder %s31, 0
      %p215 = por %p213, %p214
      %p216 = scmp.ne.s32.totalorder %s202, %s203
      %p217 = scmp.eq.s32.totalorder %s32, 3
      %p218 = por %p216, %p217
      %p220 = scmp.ne.s32.totalorder %s203, %s219
      %p221 = scmp.eq.s32.totalorder %s32, 0
      %p222 = por %p220, %p221
      %s223 = ssub.s32 %s34, %s41
      %p224 = scmp.eq.s32.totalorder %s223, 0
      %s226 = sadd.s32 %s225, 1
      %s227 = scalar_select %p224, %s225, %s226
      %p230 = pneg %p224
      %p231 = scmp.eq.s32.totalorder %s26, 3
      %p232 = por %p230, %p231
      %p233 = scmp.ne.s32.totalorder %s225, %s228
      %p234 = scmp.eq.s32.totalorder %s26, 0
      %p235 = por %p233, %p234
      %p236 = scmp.ne.s32.totalorder %s225, %s228
      %p237 = scmp.eq.s32.totalorder %s31, 3
      %p238 = por %p236, %p237
      %p239 = scmp.ne.s32.totalorder %s228, %s229
      %p240 = scmp.eq.s32.totalorder %s31, 0
      %p241 = por %p239, %p240
      %p242 = scmp.ne.s32.totalorder %s228, %s229
      %p243 = scmp.eq.s32.totalorder %s32, 3
      %p244 = por %p242, %p243
      %p246 = scmp.ne.s32.totalorder %s229, %s245
      %p247 = scmp.eq.s32.totalorder %s32, 0
      %p248 = por %p246, %p247
      %s249 = ssub.s32 %s34, %s41
      %p250 = scmp.eq.s32.totalorder %s249, 0
      %s252 = sadd.s32 %s251, 1
      %s253 = scalar_select %p250, %s251, %s252
      %p256 = pneg %p250
      %p257 = scmp.eq.s32.totalorder %s26, 3
      %p258 = por %p256, %p257
      %p259 = scmp.ne.s32.totalorder %s251, %s254
      %p260 = scmp.eq.s32.totalorder %s26, 0
      %p261 = por %p259, %p260
      %p262 = scmp.ne.s32.totalorder %s251, %s254
      %p263 = scmp.eq.s32.totalorder %s31, 3
      %p264 = por %p262, %p263
      %p265 = scmp.ne.s32.totalorder %s254, %s255
      %p266 = scmp.eq.s32.totalorder %s31, 0
      %p267 = por %p265, %p266
      %p268 = scmp.ne.s32.totalorder %s254, %s255
      %p269 = scmp.eq.s32.totalorder %s32, 3
      %p270 = por %p268, %p269
      %p272 = scmp.ne.s32.totalorder %s255, %s271
      %p273 = scmp.eq.s32.totalorder %s32, 0
      %p274 = por %p272, %p273
      %s275 = ssub.s32 %s34, %s41
      %p276 = scmp.eq.s32.totalorder %s275, 0
      %s278 = sadd.s32 %s277, 1
      %s279 = scalar_select %p276, %s277, %s278
      %p282 = pneg %p276
      %p283 = scmp.eq.s32.totalorder %s26, 3
      %p284 = por %p282, %p283
      %p285 = scmp.ne.s32.totalorder %s277, %s280
      %p286 = scmp.eq.s32.totalorder %s26, 0
      %p287 = por %p285, %p286
      %p288 = scmp.ne.s32.totalorder %s277, %s280
      %p289 = scmp.eq.s32.totalorder %s31, 3
      %p290 = por %p288, %p289
      %p291 = scmp.ne.s32.totalorder %s280, %s281
      %p292 = scmp.eq.s32.totalorder %s31, 0
      %p293 = por %p291, %p292
      %p294 = scmp.ne.s32.totalorder %s280, %s281
      %p295 = scmp.eq.s32.totalorder %s32, 3
      %p296 = por %p294, %p295
      %p298 = scmp.ne.s32.totalorder %s281, %s297
      %p299 = scmp.eq.s32.totalorder %s32, 0
      %p300 = por %p298, %p299
      %s301 = ssub.s32 %s34, %s41
      %p302 = scmp.eq.s32.totalorder %s301, 0
      %s304 = sadd.s32 %s303, 1
      %s305 = scalar_select %p302, %s303, %s304
      %p308 = pneg %p302
      %p309 = scmp.eq.s32.totalorder %s26, 3
      %p310 = por %p308, %p309
      %p311 = scmp.ne.s32.totalorder %s303, %s306
      %p312 = scmp.eq.s32.totalorder %s26, 0
      %p313 = por %p311, %p312
      %p314 = scmp.ne.s32.totalorder %s303, %s306
      %p315 = scmp.eq.s32.totalorder %s31, 3
      %p316 = por %p314, %p315
      %p317 = scmp.ne.s32.totalorder %s306, %s307
      %p318 = scmp.eq.s32.totalorder %s31, 0
      %p319 = por %p317, %p318
      %p320 = scmp.ne.s32.totalorder %s306, %s307
      %p321 = scmp.eq.s32.totalorder %s32, 3
      %p322 = por %p320, %p321
      %p324 = scmp.ne.s32.totalorder %s307, %s323
      %p325 = scmp.eq.s32.totalorder %s32, 0
      %p326 = por %p324, %p325
      %s327 = ssub.s32 %s34, %s41
      %p328 = scmp.eq.s32.totalorder %s327, 0
      %s330 = sadd.s32 %s329, 1
      %s331 = scalar_select %p328, %s329, %s330
      %p334 = pneg %p328
      %p335 = scmp.eq.s32.totalorder %s26, 3
      %p336 = por %p334, %p335
      %p337 = scmp.ne.s32.totalorder %s329, %s332
      %p338 = scmp.eq.s32.totalorder %s26, 0
      %p339 = por %p337, %p338
      %p340 = scmp.ne.s32.totalorder %s329, %s332
      %p341 = scmp.eq.s32.totalorder %s31, 3
      %p342 = por %p340, %p341
      %p343 = scmp.ne.s32.totalorder %s332, %s333
      %p344 = scmp.eq.s32.totalorder %s31, 0
      %p345 = por %p343, %p344
      %p346 = scmp.ne.s32.totalorder %s332, %s333
      %p347 = scmp.eq.s32.totalorder %s32, 3
      %p348 = por %p346, %p347
      %p350 = scmp.ne.s32.totalorder %s333, %s349
      %p351 = scmp.eq.s32.totalorder %s32, 0
      %p352 = por %p350, %p351
      %s353 = ssub.s32 %s34, %s41
      %p354 = scmp.eq.s32.totalorder %s353, 0
      %s356 = sadd.s32 %s355, 1
      %s357 = scalar_select %p354, %s355, %s356
      %p360 = pneg %p354
      %p361 = scmp.eq.s32.totalorder %s26, 3
      %p362 = por %p360, %p361
      %p363 = scmp.ne.s32.totalorder %s355, %s358
      %p364 = scmp.eq.s32.totalorder %s26, 0
      %p365 = por %p363, %p364
      %p366 = scmp.ne.s32.totalorder %s355, %s358
      %p367 = scmp.eq.s32.totalorder %s31, 3
      %p368 = por %p366, %p367
      %p369 = scmp.ne.s32.totalorder %s358, %s359
      %p370 = scmp.eq.s32.totalorder %s31, 0
      %p371 = por %p369, %p370
      %p372 = scmp.ne.s32.totalorder %s358, %s359
      %p373 = scmp.eq.s32.totalorder %s32, 3
      %p374 = por %p372, %p373
      %p376 = scmp.ne.s32.totalorder %s359, %s375
      %p377 = scmp.eq.s32.totalorder %s32, 0
      %p378 = por %p376, %p377
      %s380 = sadd.s32 %s379, 1
      %p383 = scmp.eq.s32.totalorder %s26, 3
      %p384 = scmp.ne.s32.totalorder %s379, %s381
      %p385 = scmp.eq.s32.totalorder %s26, 0
      %p386 = por %p384, %p385
      %p387 = scmp.ne.s32.totalorder %s379, %s381
      %p388 = scmp.eq.s32.totalorder %s31, 3
      %p389 = por %p387, %p388
      %p390 = scmp.ne.s32.totalorder %s381, %s382
      %p391 = scmp.eq.s32.totalorder %s31, 0
      %p392 = por %p390, %p391
      %p393 = scmp.ne.s32.totalorder %s381, %s382
      %p394 = scmp.eq.s32.totalorder %s32, 3
      %p395 = por %p393, %p394
      %p397 = scmp.ne.s32.totalorder %s382, %s396
      %p398 = scmp.eq.s32.totalorder %s32, 0
      %p399 = por %p397, %p398
      %s401 = sadd.s32 %s400, 1
      %p404 = scmp.eq.s32.totalorder %s26, 3
      %p405 = scmp.ne.s32.totalorder %s400, %s402
      %p406 = scmp.eq.s32.totalorder %s26, 0
      %p407 = por %p405, %p406
      %p408 = scmp.ne.s32.totalorder %s400, %s402
      %p409 = scmp.eq.s32.totalorder %s31, 3
      %p410 = por %p408, %p409
      %p411 = scmp.ne.s32.totalorder %s402, %s403
      %p412 = scmp.eq.s32.totalorder %s31, 0
      %p413 = por %p411, %p412
      %p414 = scmp.ne.s32.totalorder %s402, %s403
      %p415 = scmp.eq.s32.totalorder %s32, 3
      %p416 = por %p414, %p415
      %p418 = scmp.ne.s32.totalorder %s403, %s417
      %p419 = scmp.eq.s32.totalorder %s32, 0
      %p420 = por %p418, %p419
      %s422 = sadd.s32 %s421, 1
      %p425 = scmp.eq.s32.totalorder %s26, 3
      %p426 = scmp.ne.s32.totalorder %s421, %s423
      %p427 = scmp.eq.s32.totalorder %s26, 0
      %p428 = por %p426, %p427
      %p429 = scmp.ne.s32.totalorder %s421, %s423
      %p430 = scmp.eq.s32.totalorder %s31, 3
      %p431 = por %p429, %p430
      %p432 = scmp.ne.s32.totalorder %s423, %s424
      %p433 = scmp.eq.s32.totalorder %s31, 0
      %p434 = por %p432, %p433
      %p435 = scmp.ne.s32.totalorder %s423, %s424
      %p436 = scmp.eq.s32.totalorder %s32, 3
      %p437 = por %p435, %p436
      %p439 = scmp.ne.s32.totalorder %s424, %s438
      %p440 = scmp.eq.s32.totalorder %s32, 0
      %p441 = por %p439, %p440
      %s443 = sadd.s32 %s442, 1
      %p446 = scmp.eq.s32.totalorder %s26, 3
      %p447 = scmp.ne.s32.totalorder %s442, %s444
      %p448 = scmp.eq.s32.totalorder %s26, 0
      %p449 = por %p447, %p448
      %p450 = scmp.ne.s32.totalorder %s442, %s444
      %p451 = scmp.eq.s32.totalorder %s31, 3
      %p452 = por %p450, %p451
      %p453 = scmp.ne.s32.totalorder %s444, %s445
      %p454 = scmp.eq.s32.totalorder %s31, 0
      %p455 = por %p453, %p454
      %p456 = scmp.ne.s32.totalorder %s444, %s445
      %p457 = scmp.eq.s32.totalorder %s32, 3
      %p458 = por %p456, %p457
      %p460 = scmp.ne.s32.totalorder %s445, %s459
      %p461 = scmp.eq.s32.totalorder %s32, 0
      %p462 = por %p460, %p461
      %s463 = ssub.s32 %s33, %s45
      %p464 = scmp.eq.s32.totalorder %s463, 0
      %s466 = sadd.s32 %s465, 1
      %s467 = scalar_select %p464, %s465, %s466
      %p470 = pneg %p464
      %p471 = scmp.eq.s32.totalorder %s26, 3
      %p472 = por %p470, %p471
      %p473 = scmp.ne.s32.totalorder %s465, %s468
      %p474 = scmp.eq.s32.totalorder %s26, 0
      %p475 = por %p473, %p474
      %p476 = scmp.ne.s32.totalorder %s465, %s468
      %p477 = scmp.eq.s32.totalorder %s31, 3
      %p478 = por %p476, %p477
      %p479 = scmp.ne.s32.totalorder %s468, %s469
      %p480 = scmp.eq.s32.totalorder %s31, 0
      %p481 = por %p479, %p480
      %p482 = scmp.ne.s32.totalorder %s468, %s469
      %p483 = scmp.eq.s32.totalorder %s32, 3
      %p484 = por %p482, %p483
      %p486 = scmp.ne.s32.totalorder %s469, %s485
      %p487 = scmp.eq.s32.totalorder %s32, 0
      %p488 = por %p486, %p487
      %p489 = scmp.le.s32.totalorder 1, %s26
      %p490 = scmp.lt.s32.totalorder %s26, 5
      %p491 = pnand %p489, %p490
      %p492 = pneg %p491
      // Predicated region
      $region9: #{custom_bert_classifier.1} parent=5 // pred_check
        _
      $region10: #{custom_bert_classifier.1} parent=5 // pred_check_branch
        %494 = sbr.rel (%p491) target = $region12
      $region11: #{custom_bert_classifier.1} parent=5 // pred_region
        %s495 = ssub.s32 %s26, 1
        // Predicated region
        $region13: #{custom_bert_classifier.1} parent=11 // pred_check
          %p496 = pneg %p111
        $region14: #{custom_bert_classifier.1} parent=11 // pred_check_branch
          %498 = sbr.rel (%p496) target = $region16
        $region15: #{custom_bert_classifier.1} parent=11 // pred_region
          _
        $region16: #{custom_bert_classifier.1} parent=11 // pred_fallthru
          _
        // Predicated region
        $region17: #{custom_bert_classifier.1} parent=11 // pred_check
          %p499 = pneg %p392
        $region18: #{custom_bert_classifier.1} parent=11 // pred_check_branch
          %501 = sbr.rel (%p499) target = $region20
        $region19: #{custom_bert_classifier.1} parent=11 // pred_region
          _
        $region20: #{custom_bert_classifier.1} parent=11 // pred_fallthru
          _
        // Predicated region
        $region21: #{custom_bert_classifier.1} parent=11 // pred_check
          %p502 = pneg %p413
        $region22: #{custom_bert_classifier.1} parent=11 // pred_check_branch
          %504 = sbr.rel (%p502) target = $region24
        $region23: #{custom_bert_classifier.1} parent=11 // pred_region
          _
        $region24: #{custom_bert_classifier.1} parent=11 // pred_fallthru
          _
        // Predicated region
        $region25: #{custom_bert_classifier.1} parent=11 // pred_check
          %p505 = pneg %p434
        $region26: #{custom_bert_classifier.1} parent=11 // pred_check_branch
          %507 = sbr.rel (%p505) target = $region28
        $region27: #{custom_bert_classifier.1} parent=11 // pred_region
          _
        $region28: #{custom_bert_classifier.1} parent=11 // pred_fallthru
          _
        // Predicated region
        $region29: #{custom_bert_classifier.1} parent=11 // pred_check
          %p508 = pneg %p455
        $region30: #{custom_bert_classifier.1} parent=11 // pred_check_branch
          %510 = sbr.rel (%p508) target = $region32
        $region31: #{custom_bert_classifier.1} parent=11 // pred_region
          _
        $region32: #{custom_bert_classifier.1} parent=11 // pred_fallthru
          _
      $region12: #{custom_bert_classifier.1} parent=5 // pred_fallthru
        _
      %p511 = scmp.lt.s32.totalorder %s26, 4
      // Predicated region
      $region33: #{custom_bert_classifier.1} parent=5 // pred_check
        %p512 = pneg %p511
      $region34: #{custom_bert_classifier.1} parent=5 // pred_check_branch
        %514 = sbr.rel (%p512) target = $region36
      $region35: #{custom_bert_classifier.1} parent=5 // pred_region
        // Predicated region
        $region37: #{custom_bert_classifier.1} parent=35 // pred_check
          %p515 = pneg %p58
        $region38: #{custom_bert_classifier.1} parent=35 // pred_check_branch
          %517 = sbr.rel (%p515) target = $region40
        $region39: #{custom_bert_classifier.1} parent=35 // pred_region
          %p518 = scmp.lt.s32.totalorder %s33, 1
          %s519 = scalar_select %p518, %s33, 1
          %s520 = smul.addr %s519, 8
          %s521 = scalar_lea.vmem %s0, %s520
        $region40: #{custom_bert_classifier.1} parent=35 // pred_fallthru
          _
        // Predicated region
        $region41: #{custom_bert_classifier.1} parent=35 // pred_check
          %p522 = pneg %p84
        $region42: #{custom_bert_classifier.1} parent=35 // pred_check_branch
          %524 = sbr.rel (%p522) target = $region44
        $region43: #{custom_bert_classifier.1} parent=35 // pred_region
          %p525 = scmp.lt.s32.totalorder %s33, 1
          %s526 = scalar_select %p525, %s33, 1
          %s527 = scalar_lea.vmem %s1, %s526
        $region44: #{custom_bert_classifier.1} parent=35 // pred_fallthru
          _
        // Predicated region
        $region45: #{custom_bert_classifier.1} parent=35 // pred_check
          %p528 = pneg %p131
        $region46: #{custom_bert_classifier.1} parent=35 // pred_check_branch
          %530 = sbr.rel (%p528) target = $region48
        $region47: #{custom_bert_classifier.1} parent=35 // pred_region
          %p531 = scmp.lt.s32.totalorder %s34, 1
          %s532 = scalar_select %p531, %s34, 1
          %s533 = smul.addr %s532, 4
          %s534 = smul.addr %s533, 4
          %s535 = scalar_lea.vmem %s3, %s534
        $region48: #{custom_bert_classifier.1} parent=35 // pred_fallthru
          _
        // Predicated region
        $region49: #{custom_bert_classifier.1} parent=35 // pred_check
          %p536 = pneg %p157
        $region50: #{custom_bert_classifier.1} parent=35 // pred_check_branch
          %538 = sbr.rel (%p536) target = $region52
        $region51: #{custom_bert_classifier.1} parent=35 // pred_region
          %p539 = scmp.lt.s32.totalorder %s34, 1
          %s540 = scalar_select %p539, %s34, 1
          %s541 = scalar_lea.vmem %s4, %s540
        $region52: #{custom_bert_classifier.1} parent=35 // pred_fallthru
          _
        // Predicated region
        $region53: #{custom_bert_classifier.1} parent=35 // pred_check
          %p542 = pneg %p183
        $region54: #{custom_bert_classifier.1} parent=35 // pred_check_branch
          %544 = sbr.rel (%p542) target = $region56
        $region55: #{custom_bert_classifier.1} parent=35 // pred_region
          %p545 = scmp.lt.s32.totalorder %s34, 1
          %s546 = scalar_select %p545, %s34, 1
          %s547 = smul.addr %s546, 4
          %s548 = smul.addr %s547, 4
          %s549 = scalar_lea.vmem %s5, %s548
        $region56: #{custom_bert_classifier.1} parent=35 // pred_fallthru
          _
        // Predicated region
        $region57: #{custom_bert_classifier.1} parent=35 // pred_check
          %p550 = pneg %p209
        $region58: #{custom_bert_classifier.1} parent=35 // pred_check_branch
          %552 = sbr.rel (%p550) target = $region60
        $region59: #{custom_bert_classifier.1} parent=35 // pred_region
          %p553 = scmp.lt.s32.totalorder %s34, 1
          %s554 = scalar_select %p553, %s34, 1
          %s555 = scalar_lea.vmem %s6, %s554
        $region60: #{custom_bert_classifier.1} parent=35 // pred_fallthru
          _
        // Predicated region
        $region61: #{custom_bert_classifier.1} parent=35 // pred_check
          %p556 = pneg %p235
        $region62: #{custom_bert_classifier.1} parent=35 // pred_check_branch
          %558 = sbr.rel (%p556) target = $region64
        $region63: #{custom_bert_classifier.1} parent=35 // pred_region
          %p559 = scmp.lt.s32.totalorder %s34, 1
          %s560 = scalar_select %p559, %s34, 1
          %s561 = smul.addr %s560, 2
          %s562 = scalar_lea.vmem %s7, %s561
        $region64: #{custom_bert_classifier.1} parent=35 // pred_fallthru
          _
        // Predicated region
        $region65: #{custom_bert_classifier.1} parent=35 // pred_check
          %p563 = pneg %p261
        $region66: #{custom_bert_classifier.1} parent=35 // pred_check_branch
          %565 = sbr.rel (%p563) target = $region68
        $region67: #{custom_bert_classifier.1} parent=35 // pred_region
          %p566 = scmp.lt.s32.totalorder %s34, 1
          %s567 = scalar_select %p566, %s34, 1
          %s568 = smul.addr %s567, 4
          %s569 = smul.addr %s568, 4
          %s570 = scalar_lea.vmem %s8, %s569
        $region68: #{custom_bert_classifier.1} parent=35 // pred_fallthru
          _
        // Predicated region
        $region69: #{custom_bert_classifier.1} parent=35 // pred_check
          %p571 = pneg %p287
        $region70: #{custom_bert_classifier.1} parent=35 // pred_check_branch
          %573 = sbr.rel (%p571) target = $region72
        $region71: #{custom_bert_classifier.1} parent=35 // pred_region
          %p574 = scmp.lt.s32.totalorder %s34, 1
          %s575 = scalar_select %p574, %s34, 1
          %s576 = scalar_lea.vmem %s9, %s575
        $region72: #{custom_bert_classifier.1} parent=35 // pred_fallthru
          _
        // Predicated region
        $region73: #{custom_bert_classifier.1} parent=35 // pred_check
          %p577 = pneg %p313
        $region74: #{custom_bert_classifier.1} parent=35 // pred_check_branch
          %579 = sbr.rel (%p577) target = $region76
        $region75: #{custom_bert_classifier.1} parent=35 // pred_region
          %p580 = scmp.lt.s32.totalorder %s34, 1
          %s581 = scalar_select %p580, %s34, 1
          %s582 = smul.addr %s581, 8
          %s583 = smul.addr %s582, 4
          %s584 = scalar_lea.vmem %s10, %s583
        $region76: #{custom_bert_classifier.1} parent=35 // pred_fallthru
          _
        // Predicated region
        $region77: #{custom_bert_classifier.1} parent=35 // pred_check
          %p585 = pneg %p339
        $region78: #{custom_bert_classifier.1} parent=35 // pred_check_branch
          %587 = sbr.rel (%p585) target = $region80
        $region79: #{custom_bert_classifier.1} parent=35 // pred_region
          %p588 = scmp.lt.s32.totalorder %s34, 1
          %s589 = scalar_select %p588, %s34, 1
          %s590 = scalar_lea.vmem %s11, %s589
        $region80: #{custom_bert_classifier.1} parent=35 // pred_fallthru
          _
        // Predicated region
        $region81: #{custom_bert_classifier.1} parent=35 // pred_check
          %p591 = pneg %p365
        $region82: #{custom_bert_classifier.1} parent=35 // pred_check_branch
          %593 = sbr.rel (%p591) target = $region84
        $region83: #{custom_bert_classifier.1} parent=35 // pred_region
          %p594 = scmp.lt.s32.totalorder %s34, 1
          %s595 = scalar_select %p594, %s34, 1
          %s596 = smul.addr %s595, 2
          %s597 = scalar_lea.vmem %s12, %s596
        $region84: #{custom_bert_classifier.1} parent=35 // pred_fallthru
          _
      $region36: #{custom_bert_classifier.1} parent=5 // pred_fallthru
        _
      %p598 = scmp.le.s32.totalorder 1, %s26
      %p599 = scmp.lt.s32.totalorder %s26, 5
      %p600 = pnand %p598, %p599
      %p601 = pneg %p600
      // Predicated region
      $region85: #{custom_bert_classifier.1} parent=5 // pred_check
        _
      $region86: #{custom_bert_classifier.1} parent=5 // pred_check_branch
        %603 = sbr.rel (%p600) target = $region88
      $region87: #{custom_bert_classifier.1} parent=5 // pred_region
        %s604 = ssub.s32 %s26, 1
        %p605 = scmp.lt.s32.totalorder %s35, 1
        %s606 = scalar_select %p605, %s35, 1
        %s607 = smul.addr %s606, 8
        %s608 = scalar_lea.vmem %s0, %s607
        %p609 = pneg %p64
        %p610 = pneg %p61
        %p611 = scmp.lt.s32.totalorder %s35, 1
        %s612 = scalar_select %p611, %s35, 1
        %s613 = scalar_lea.vmem %s1, %s612
        %p614 = pneg %p90
        %p615 = pneg %p87
        %p616 = pneg %p111
        %p617 = pneg %p108
        %p618 = scmp.lt.s32.totalorder %s36, 1
        %s619 = scalar_select %p618, %s36, 1
        %s620 = smul.addr %s619, 4
        %s621 = smul.addr %s620, 4
        %s622 = scalar_lea.vmem %s3, %s621
        %p623 = pneg %p137
        %p624 = pneg %p134
        %p625 = scmp.lt.s32.totalorder %s36, 1
        %s626 = scalar_select %p625, %s36, 1
        %s627 = scalar_lea.vmem %s4, %s626
        %p628 = pneg %p163
        %p629 = pneg %p160
        %p630 = scmp.lt.s32.totalorder %s36, 1
        %s631 = scalar_select %p630, %s36, 1
        %s632 = smul.addr %s631, 4
        %s633 = smul.addr %s632, 4
        %s634 = scalar_lea.vmem %s5, %s633
        %p635 = pneg %p189
        %p636 = pneg %p186
        %p637 = scmp.lt.s32.totalorder %s36, 1
        %s638 = scalar_select %p637, %s36, 1
        %s639 = scalar_lea.vmem %s6, %s638
        %p640 = pneg %p215
        %p641 = pneg %p212
        %p642 = scmp.lt.s32.totalorder %s36, 1
        %s643 = scalar_select %p642, %s36, 1
        %s644 = smul.addr %s643, 2
        %s645 = scalar_lea.vmem %s7, %s644
        %p646 = pneg %p241
        %p647 = pneg %p238
        %p648 = scmp.lt.s32.totalorder %s36, 1
        %s649 = scalar_select %p648, %s36, 1
        %s650 = smul.addr %s649, 4
        %s651 = smul.addr %s650, 4
        %s652 = scalar_lea.vmem %s8, %s651
        %p653 = pneg %p267
        %p654 = pneg %p264
        %p655 = scmp.lt.s32.totalorder %s36, 1
        %s656 = scalar_select %p655, %s36, 1
        %s657 = scalar_lea.vmem %s9, %s656
        %p658 = pneg %p293
        %p659 = pneg %p290
        %p660 = scmp.lt.s32.totalorder %s36, 1
        %s661 = scalar_select %p660, %s36, 1
        %s662 = smul.addr %s661, 8
        %s663 = smul.addr %s662, 4
        %s664 = scalar_lea.vmem %s10, %s663
        %p665 = pneg %p319
        %p666 = pneg %p316
        %p667 = scmp.lt.s32.totalorder %s36, 1
        %s668 = scalar_select %p667, %s36, 1
        %s669 = scalar_lea.vmem %s11, %s668
        %p670 = pneg %p345
        %p671 = pneg %p342
        %p672 = scmp.lt.s32.totalorder %s36, 1
        %s673 = scalar_select %p672, %s36, 1
        %s674 = smul.addr %s673, 2
        %s675 = scalar_lea.vmem %s12, %s674
        %p676 = pneg %p371
        %p677 = pneg %p368
        %p678 = pneg %p392
        %p679 = pneg %p389
        %p680 = pneg %p413
        %p681 = pneg %p410
        %p682 = pneg %p434
        %p683 = pneg %p431
        %p684 = pneg %p455
        %p685 = pneg %p452
        %p686 = pneg %p481
        %p687 = pneg %p478
        %s688 = sand.u32 %s468, 1
        %s689 = scalar_lea.sflag [#allocation4], %s688
        %s690 = sand.u32 %s468, 1
        %s691 = scalar_lea.vmem [#allocation3], %s690
        %p692 = scmp.lt.s32.totalorder %s35, 1
        %s693 = scalar_select %p692, %s35, 1
        %s694 = smul.addr %s693, 8
        %s695 = scalar_lea.vmem %s0, %s694
        %p696 = scmp.lt.s32.totalorder %s35, 1
        %s697 = scalar_select %p696, %s35, 1
        %s698 = scalar_lea.vmem %s1, %s697
        %p699 = scmp.lt.s32.totalorder %s36, 1
        %s700 = scalar_select %p699, %s36, 1
        %s701 = smul.addr %s700, 4
        %s702 = smul.addr %s701, 4
        %s703 = scalar_lea.vmem %s3, %s702
        %p704 = scmp.lt.s32.totalorder %s36, 1
        %s705 = scalar_select %p704, %s36, 1
        %s706 = scalar_lea.vmem %s4, %s705
        %p707 = scmp.lt.s32.totalorder %s36, 1
        %s708 = scalar_select %p707, %s36, 1
        %s709 = smul.addr %s708, 4
        %s710 = smul.addr %s709, 4
        %s711 = scalar_lea.vmem %s5, %s710
        %p712 = scmp.lt.s32.totalorder %s36, 1
        %s713 = scalar_select %p712, %s36, 1
        %s714 = scalar_lea.vmem %s6, %s713
        %p715 = scmp.lt.s32.totalorder %s36, 1
        %s716 = scalar_select %p715, %s36, 1
        %s717 = smul.addr %s716, 2
        %s718 = scalar_lea.vmem %s7, %s717
        %p719 = scmp.lt.s32.totalorder %s36, 1
        %s720 = scalar_select %p719, %s36, 1
        %s721 = smul.addr %s720, 4
        %s722 = smul.addr %s721, 4
        %s723 = scalar_lea.vmem %s8, %s722
        %p724 = scmp.lt.s32.totalorder %s36, 1
        %s725 = scalar_select %p724, %s36, 1
        %s726 = scalar_lea.vmem %s9, %s725
        %p727 = scmp.lt.s32.totalorder %s36, 1
        %s728 = scalar_select %p727, %s36, 1
        %s729 = smul.addr %s728, 8
        %s730 = smul.addr %s729, 4
        %s731 = scalar_lea.vmem %s10, %s730
        %p732 = scmp.lt.s32.totalorder %s36, 1
        %s733 = scalar_select %p732, %s36, 1
        %s734 = scalar_lea.vmem %s11, %s733
        %p735 = scmp.lt.s32.totalorder %s36, 1
        %s736 = scalar_select %p735, %s36, 1
        %s737 = smul.addr %s736, 2
        %s738 = scalar_lea.vmem %s12, %s737
        %p740 = scmp.eq.s32.totalorder %s36, 0
        // Predicated region
        $region89: #{custom_bert_classifier.1} parent=87 // pred_check
          %p741 = pneg %p740
        $region90: #{custom_bert_classifier.1} parent=87 // pred_check_branch
          %743 = sbr.rel (%p741) target = $region92
        $region91: #{custom_bert_classifier.1} parent=87 // pred_region
          %v744 = vld [vmem:[%s695] sm:$0xff]
          %v745 = vld [vmem:[%s2] sm:$0x1]
          %v746 = vld [vmem:[%s2 + $0x1] sm:$0x1]
          %vm747 = vcmask 261120
          %v748 = vsel %vm747, %v744, 0.0
          %749 = vadd.xlane.f32.xlu0 %v748
          %v750 = vpop.xlane.xlu0 %749
          %v751 = vrcp.pop 32.0
          %v752 = vmul.f32 %v750, %v751
          %v753 = vsub.f32 %v744, %v752
          %v754 = vmul.f32 %v753, %v753
          %v755 = vsel %vm747, %v754, 0.0
          %756 = vadd.xlane.f32.xlu0 %v755
          %v757 = vpop.xlane.xlu0 %756
          %v758 = vmul.f32 %v757, %v751
          %v759 = vadd.f32 %v758, 1e-12
          %v760 = vrsqrt.pop %v759
          %v761 = vmul.f32 %v753, %v760
          %v762 = vlaneseq
          %v763 = vshrl.u32 %v762, 7
          %v764 = vsub.s32 0, %v763
          %v765 = vrot.slane %v745, %v764
          %v766 = vmul.f32 %v761, %v765
          %v767 = vlaneseq
          %v768 = vshrl.u32 %v767, 7
          %v769 = vsub.s32 0, %v768
          %v770 = vrot.slane %v746, %v769
          %v771 = vadd.f32 %v766, %v770
          %772 = vst.msk [vmem:[#allocation2] sm:$0xff] %vm747, %v771
        $region92: #{custom_bert_classifier.1} parent=87 // pred_fallthru
          _
        %v773 = vld [vmem:[#allocation2] sm:$0xff]
        %v774 = vld [vmem:[%s703] sm:$0xf]
        %v775 = vld [vmem:[%s703 + $0x4] sm:$0xf]
        %v776 = vld [vmem:[%s703 + $0x8] sm:$0xf]
        %v777 = vld [vmem:[%s703 + $0xc] sm:$0xf]
        %v778 = vld [vmem:[%s706] sm:$0x1]
        %v779 = vpack.c.bf16 %v773, %v773
        %v781 = vlaneseq
        %v782 = vshrl.u32 %v781, 7
        %v783 = vsub.s32 0, %v782
        %v784 = vrot.slane %v778, %v783
        %v790 = vunpack.c.l.b16 %v774
        %v791 = vunpack.c.l.b16 %v775
        %v792 = vunpack.c.l.b16 %v776
        %v793 = vunpack.c.l.b16 %v777
        %v794 = vpack.c.b16 %v791, %v790
        %v795 = vpack.c.b16 %v793, %v792
        %vm798 = vcmask 261120
        %v800 = vsel %vm798, %v779, 0
        %802 = vmatprep.subr.bf16.mxu0 0
        %803 = vmatpush1.bf16.msra.mxu0 %v794
        %804 = vmatprep.subr.bf16.mxu0 0
        %805 = vmatpush1.bf16.msra.mxu0 %v795
        %806 = vmatprep.subr.bf16.mxu0 0
        %807 = vmatpush1.bf16.msra.mxu0 0
        %808 = vmatprep.subr.bf16.mxu0 0
        %809 = vmatpush1.bf16.msra.mxu0 0
        %810 = vmatprep.subr.bf16.mxu0 0
        %811 = vmatpush1.bf16.msra.mxu0 0
        %812 = vmatprep.subr.bf16.mxu0 0
        %813 = vmatpush1.bf16.msra.mxu0 0
        %814 = vmatprep.subr.bf16.mxu0 0
        %815 = vmatpush1.bf16.msra.mxu0 0
        %816 = vmatprep.subr.bf16.mxu0 0
        %817 = vmatpush1.bf16.msra.mxu0 0
        %818 = vmatprep.subr.bf16.mxu0 0
        %819 = vmatpush1.bf16.msra.mxu0 0
        %820 = vmatprep.subr.bf16.mxu0 0
        %821 = vmatpush1.bf16.msra.mxu0 0
        %822 = vmatprep.subr.bf16.mxu0 0
        %823 = vmatpush1.bf16.msra.mxu0 0
        %824 = vmatprep.subr.bf16.mxu0 0
        %825 = vmatpush1.bf16.msra.mxu0 0
        %826 = vmatprep.subr.bf16.mxu0 0
        %827 = vmatpush1.bf16.msra.mxu0 0
        %828 = vmatprep.subr.bf16.mxu0 0
        %829 = vmatpush1.bf16.msra.mxu0 0
        %830 = vmatprep.subr.bf16.mxu0 0
        %831 = vmatpush1.bf16.msra.mxu0 0
        %832 = vmatprep.subr.bf16.mxu0 0
        %833 = vmatpush1.bf16.msra.mxu0 0
        %834 = vmatprep.mubr.bf16.mxu0 0
        %835 = vmatmul.mubr.bf16.gmra.mrb[0].mxu0 %v800
        %v836 = vpop.f32.mrb[0].mxu0
        %v837 = vadd.f32 %v784, %v836
        %v838 = vpop.f32.mrb[0].mxu0
        %v839 = vpop.f32.mrb[0].mxu0
        %v840 = vpop.f32.mrb[0].mxu0
        %841 = vdwg.mxu0
        %v842 = vmul.f32 %v837, 0.35355338
        %844 = vrot.lane.b32.xlu0 %v842, 120
        %v845 = vpop.permute.xlu0 %844
        %847 = vrot.lane.b32.xlu0 %v842, 112
        %v848 = vpop.permute.xlu0 %847
        %850 = vrot.lane.b32.xlu0 %v842, 104
        %v851 = vpop.permute.xlu0 %850
        %v853 = vpack.c.bf16 %v842, %v842
        %v854 = vpack.c.bf16 %v845, %v845
        %v855 = vpack.c.bf16 %v848, %v848
        %v856 = vpack.c.bf16 %v851, %v851
        %858 = vrot.lane.b32.xlu0 %v837, 120
        %v859 = vpop.permute.xlu0 %858
        %861 = vrot.lane.b32.xlu0 %v837, 112
        %v862 = vpop.permute.xlu0 %861
        %864 = vrot.lane.b32.xlu0 %v837, 104
        %v865 = vpop.permute.xlu0 %864
        %v867 = vpack.c.bf16 %v837, %v837
        %v868 = vpack.c.bf16 %v859, %v859
        %v869 = vpack.c.bf16 %v862, %v862
        %v870 = vpack.c.bf16 %v865, %v865
        %v871 = vld [vmem:[%s698] sm:$0x1]
        %v873 = vlaneseq
        %v874 = vshrl.u32 %v873, 7
        %v875 = vsub.s32 0, %v874
        %v876 = vrot.slane %v871, %v875
        %879 = vrot.lane.b32.xlu0 %v867, 96
        %v880 = vpop.permute.xlu0 %879
        %vm881 = vcmask 64512
        %v883 = vsel %vm881, %v853, 0
        %v886 = vsel %vm881, %v880, 0
        %888 = vmatprep.subr.bf16.mxu0 0
        %889 = vmatpush1.bf16.xpose.msra.mxu0 %v886
        %890 = vmatprep.subr.bf16.mxu0 0
        %891 = vmatpush1.bf16.xpose.msra.mxu0 0
        %892 = vmatprep.subr.bf16.mxu0 0
        %893 = vmatpush1.bf16.xpose.msra.mxu0 0
        %894 = vmatprep.subr.bf16.mxu0 0
        %895 = vmatpush1.bf16.xpose.msra.mxu0 0
        %896 = vmatprep.subr.bf16.mxu0 0
        %897 = vmatpush1.bf16.xpose.msra.mxu0 0
        %898 = vmatprep.subr.bf16.mxu0 0
        %899 = vmatpush1.bf16.xpose.msra.mxu0 0
        %900 = vmatprep.subr.bf16.mxu0 0
        %901 = vmatpush1.bf16.xpose.msra.mxu0 0
        %902 = vmatprep.subr.bf16.mxu0 0
        %903 = vmatpush1.bf16.xpose.msra.mxu0 0
        %904 = vmatprep.subr.bf16.mxu0 0
        %905 = vmatpush1.bf16.xpose.msra.mxu0 0
        %906 = vmatprep.subr.bf16.mxu0 0
        %907 = vmatpush1.bf16.xpose.msra.mxu0 0
        %908 = vmatprep.subr.bf16.mxu0 0
        %909 = vmatpush1.bf16.xpose.msra.mxu0 0
        %910 = vmatprep.subr.bf16.mxu0 0
        %911 = vmatpush1.bf16.xpose.msra.mxu0 0
        %912 = vmatprep.subr.bf16.mxu0 0
        %913 = vmatpush1.bf16.xpose.msra.mxu0 0
        %914 = vmatprep.subr.bf16.mxu0 0
        %915 = vmatpush1.bf16.xpose.msra.mxu0 0
        %916 = vmatprep.subr.bf16.mxu0 0
        %917 = vmatpush1.bf16.xpose.msra.mxu0 0
        %918 = vmatprep.subr.bf16.mxu0 0
        %919 = vmatpush1.bf16.xpose.msra.mxu0 0
        %920 = vmatprep.mubr.bf16.mxu0 0
        %921 = vmatmul.mubr.bf16.gmra.mrb[0].mxu0 %v883
        %v922 = vpop.f32.mrb[0].mxu0
        %v923 = vadd.f32 %v876, %v922
        %v924 = vpop.f32.mrb[0].mxu0
        %v925 = vpop.f32.mrb[0].mxu0
        %v926 = vpop.f32.mrb[0].mxu0
        %927 = vdwg.mxu0
        %929 = vrot.lane.b32.xlu0 %v868, 96
        %v930 = vpop.permute.xlu0 %929
        %v932 = vsel %vm881, %v854, 0
        %v935 = vsel %vm881, %v930, 0
        %937 = vmatprep.subr.bf16.mxu0 0
        %938 = vmatpush1.bf16.xpose.msra.mxu0 %v935
        %939 = vmatprep.subr.bf16.mxu0 0
        %940 = vmatpush1.bf16.xpose.msra.mxu0 0
        %941 = vmatprep.subr.bf16.mxu0 0
        %942 = vmatpush1.bf16.xpose.msra.mxu0 0
        %943 = vmatprep.subr.bf16.mxu0 0
        %944 = vmatpush1.bf16.xpose.msra.mxu0 0
        %945 = vmatprep.subr.bf16.mxu0 0
        %946 = vmatpush1.bf16.xpose.msra.mxu0 0
        %947 = vmatprep.subr.bf16.mxu0 0
        %948 = vmatpush1.bf16.xpose.msra.mxu0 0
        %949 = vmatprep.subr.bf16.mxu0 0
        %950 = vmatpush1.bf16.xpose.msra.mxu0 0
        %951 = vmatprep.subr.bf16.mxu0 0
        %952 = vmatpush1.bf16.xpose.msra.mxu0 0
        %953 = vmatprep.subr.bf16.mxu0 0
        %954 = vmatpush1.bf16.xpose.msra.mxu0 0
        %955 = vmatprep.subr.bf16.mxu0 0
        %956 = vmatpush1.bf16.xpose.msra.mxu0 0
        %957 = vmatprep.subr.bf16.mxu0 0
        %958 = vmatpush1.bf16.xpose.msra.mxu0 0
        %959 = vmatprep.subr.bf16.mxu0 0
        %960 = vmatpush1.bf16.xpose.msra.mxu0 0
        %961 = vmatprep.subr.bf16.mxu0 0
        %962 = vmatpush1.bf16.xpose.msra.mxu0 0
        %963 = vmatprep.subr.bf16.mxu0 0
        %964 = vmatpush1.bf16.xpose.msra.mxu0 0
        %965 = vmatprep.subr.bf16.mxu0 0
        %966 = vmatpush1.bf16.xpose.msra.mxu0 0
        %967 = vmatprep.subr.bf16.mxu0 0
        %968 = vmatpush1.bf16.xpose.msra.mxu0 0
        %969 = vmatprep.mubr.bf16.mxu0 0
        %970 = vmatmul.mubr.bf16.gmra.mrb[0].mxu0 %v932
        %v971 = vpop.f32.mrb[0].mxu0
        %v972 = vadd.f32 %v876, %v971
        %v973 = vpop.f32.mrb[0].mxu0
        %v974 = vpop.f32.mrb[0].mxu0
        %v975 = vpop.f32.mrb[0].mxu0
        %976 = vdwg.mxu0
        %978 = vrot.lane.b32.xlu0 %v869, 96
        %v979 = vpop.permute.xlu0 %978
        %v981 = vsel %vm881, %v855, 0
        %v984 = vsel %vm881, %v979, 0
        %986 = vmatprep.subr.bf16.mxu0 0
        %987 = vmatpush1.bf16.xpose.msra.mxu0 %v984
        %988 = vmatprep.subr.bf16.mxu0 0
        %989 = vmatpush1.bf16.xpose.msra.mxu0 0
        %990 = vmatprep.subr.bf16.mxu0 0
        %991 = vmatpush1.bf16.xpose.msra.mxu0 0
        %992 = vmatprep.subr.bf16.mxu0 0
        %993 = vmatpush1.bf16.xpose.msra.mxu0 0
        %994 = vmatprep.subr.bf16.mxu0 0
        %995 = vmatpush1.bf16.xpose.msra.mxu0 0
        %996 = vmatprep.subr.bf16.mxu0 0
        %997 = vmatpush1.bf16.xpose.msra.mxu0 0
        %998 = vmatprep.subr.bf16.mxu0 0
        %999 = vmatpush1.bf16.xpose.msra.mxu0 0
        %1000 = vmatprep.subr.bf16.mxu0 0
        %1001 = vmatpush1.bf16.xpose.msra.mxu0 0
        %1002 = vmatprep.subr.bf16.mxu0 0
        %1003 = vmatpush1.bf16.xpose.msra.mxu0 0
        %1004 = vmatprep.subr.bf16.mxu0 0
        %1005 = vmatpush1.bf16.xpose.msra.mxu0 0
        %1006 = vmatprep.subr.bf16.mxu0 0
        %1007 = vmatpush1.bf16.xpose.msra.mxu0 0
        %1008 = vmatprep.subr.bf16.mxu0 0
        %1009 = vmatpush1.bf16.xpose.msra.mxu0 0
        %1010 = vmatprep.subr.bf16.mxu0 0
        %1011 = vmatpush1.bf16.xpose.msra.mxu0 0
        %1012 = vmatprep.subr.bf16.mxu0 0
        %1013 = vmatpush1.bf16.xpose.msra.mxu0 0
        %1014 = vmatprep.subr.bf16.mxu0 0
        %1015 = vmatpush1.bf16.xpose.msra.mxu0 0
        %1016 = vmatprep.subr.bf16.mxu0 0
        %1017 = vmatpush1.bf16.xpose.msra.mxu0 0
        %1018 = vmatprep.mubr.bf16.mxu0 0
        %1019 = vmatmul.mubr.bf16.gmra.mrb[0].mxu0 %v981
        %v1020 = vpop.f32.mrb[0].mxu0
        %v1021 = vadd.f32 %v876, %v1020
        %v1022 = vpop.f32.mrb[0].mxu0
        %v1023 = vpop.f32.mrb[0].mxu0
        %v1024 = vpop.f32.mrb[0].mxu0
        %1025 = vdwg.mxu0
        %1027 = vrot.lane.b32.xlu0 %v870, 96
        %v1028 = vpop.permute.xlu0 %1027
        %v1030 = vsel %vm881, %v856, 0
        %v1033 = vsel %vm881, %v1028, 0
        %1035 = vmatprep.subr.bf16.mxu0 0
        %1036 = vmatpush1.bf16.xpose.msra.mxu0 %v1033
        %1037 = vmatprep.subr.bf16.mxu0 0
        %1038 = vmatpush1.bf16.xpose.msra.mxu0 0
        %1039 = vmatprep.subr.bf16.mxu0 0
        %1040 = vmatpush1.bf16.xpose.msra.mxu0 0
        %1041 = vmatprep.subr.bf16.mxu0 0
        %1042 = vmatpush1.bf16.xpose.msra.mxu0 0
        %1043 = vmatprep.subr.bf16.mxu0 0
        %1044 = vmatpush1.bf16.xpose.msra.mxu0 0
        %1045 = vmatprep.subr.bf16.mxu0 0
        %1046 = vmatpush1.bf16.xpose.msra.mxu0 0
        %1047 = vmatprep.subr.bf16.mxu0 0
        %1048 = vmatpush1.bf16.xpose.msra.mxu0 0
        %1049 = vmatprep.subr.bf16.mxu0 0
        %1050 = vmatpush1.bf16.xpose.msra.mxu0 0
        %1051 = vmatprep.subr.bf16.mxu0 0
        %1052 = vmatpush1.bf16.xpose.msra.mxu0 0
        %1053 = vmatprep.subr.bf16.mxu0 0
        %1054 = vmatpush1.bf16.xpose.msra.mxu0 0
        %1055 = vmatprep.subr.bf16.mxu0 0
        %1056 = vmatpush1.bf16.xpose.msra.mxu0 0
        %1057 = vmatprep.subr.bf16.mxu0 0
        %1058 = vmatpush1.bf16.xpose.msra.mxu0 0
        %1059 = vmatprep.subr.bf16.mxu0 0
        %1060 = vmatpush1.bf16.xpose.msra.mxu0 0
        %1061 = vmatprep.subr.bf16.mxu0 0
        %1062 = vmatpush1.bf16.xpose.msra.mxu0 0
        %1063 = vmatprep.subr.bf16.mxu0 0
        %1064 = vmatpush1.bf16.xpose.msra.mxu0 0
        %1065 = vmatprep.subr.bf16.mxu0 0
        %1066 = vmatpush1.bf16.xpose.msra.mxu0 0
        %1067 = vmatprep.mubr.bf16.mxu0 0
        %1068 = vmatmul.mubr.bf16.gmra.mrb[0].mxu0 %v1030
        %v1069 = vpop.f32.mrb[0].mxu0
        %v1070 = vadd.f32 %v876, %v1069
        %v1071 = vpop.f32.mrb[0].mxu0
        %v1072 = vpop.f32.mrb[0].mxu0
        %v1073 = vpop.f32.mrb[0].mxu0
        %1074 = vdwg.mxu0
        %v1075 = vsel %vm881, %v923, -inf
        %1076 = vmax.xlane.f32.xlu0 %v1075
        %v1077 = vpop.xlane.xlu0 %1076
        %v1078 = vsel %vm881, %v972, -inf
        %1079 = vmax.xlane.f32.xlu0 %v1078
        %v1080 = vpop.xlane.xlu0 %1079
        %v1081 = vsel %vm881, %v1021, -inf
        %1082 = vmax.xlane.f32.xlu0 %v1081
        %v1083 = vpop.xlane.xlu0 %1082
        %v1084 = vsel %vm881, %v1070, -inf
        %1085 = vmax.xlane.f32.xlu0 %v1084
        %v1086 = vpop.xlane.xlu0 %1085
        %v1087 = vsub.f32 %v923, %v1077
        %v1088 = vsub.f32 %v972, %v1080
        %v1089 = vsub.f32 %v1021, %v1083
        %v1090 = vsub.f32 %v1070, %v1086
        %v1091 = vmul.f32 %v1087, 1.442695
        %v1092 = vpow.pop %v1091
        %v1093 = vmul.f32 %v1088, 1.442695
        %v1094 = vpow.pop %v1093
        %v1095 = vmul.f32 %v1089, 1.442695
        %v1096 = vpow.pop %v1095
        %v1097 = vmul.f32 %v1090, 1.442695
        %v1098 = vpow.pop %v1097
        %v1099 = vsel %vm881, %v1092, 0.0
        %1100 = vadd.xlane.f32.xlu0 %v1099
        %v1101 = vpop.xlane.xlu0 %1100
        %v1102 = vsel %vm881, %v1094, 0.0
        %1103 = vadd.xlane.f32.xlu0 %v1102
        %v1104 = vpop.xlane.xlu0 %1103
        %v1105 = vsel %vm881, %v1096, 0.0
        %1106 = vadd.xlane.f32.xlu0 %v1105
        %v1107 = vpop.xlane.xlu0 %1106
        %v1108 = vsel %vm881, %v1098, 0.0
        %1109 = vadd.xlane.f32.xlu0 %v1108
        %v1110 = vpop.xlane.xlu0 %1109
        %v1111 = vrcp.pop %v1101
        %v1112 = vrcp.pop %v1104
        %v1113 = vrcp.pop %v1107
        %v1114 = vrcp.pop %v1110
        %v1115 = vmul.f32 %v1092, %v1111
        %v1116 = vmul.f32 %v1094, %v1112
        %v1117 = vmul.f32 %v1096, %v1113
        %v1118 = vmul.f32 %v1098, %v1114
        %v1119 = vpack.c.bf16 %v1115, %v1115
        %v1120 = vpack.c.bf16 %v1116, %v1116
        %v1121 = vpack.c.bf16 %v1117, %v1117
        %v1122 = vpack.c.bf16 %v1118, %v1118
        %1123 = vrot.lane.b32.xlu0 %v867, 64
        %v1124 = vpop.permute.xlu0 %1123
        %v1126 = vsel %vm881, %v1119, 0
        %vm1128 = vcmask 1043456
        %v1130 = vsel %vm1128, %v1124, 0
        %1132 = vmatprep.subr.bf16.mxu0 0
        %1133 = vmatpush1.bf16.msra.mxu0 %v1130
        %1134 = vmatprep.subr.bf16.mxu0 0
        %1135 = vmatpush1.bf16.msra.mxu0 0
        %1136 = vmatprep.subr.bf16.mxu0 0
        %1137 = vmatpush1.bf16.msra.mxu0 0
        %1138 = vmatprep.subr.bf16.mxu0 0
        %1139 = vmatpush1.bf16.msra.mxu0 0
        %1140 = vmatprep.subr.bf16.mxu0 0
        %1141 = vmatpush1.bf16.msra.mxu0 0
        %1142 = vmatprep.subr.bf16.mxu0 0
        %1143 = vmatpush1.bf16.msra.mxu0 0
        %1144 = vmatprep.subr.bf16.mxu0 0
        %1145 = vmatpush1.bf16.msra.mxu0 0
        %1146 = vmatprep.subr.bf16.mxu0 0
        %1147 = vmatpush1.bf16.msra.mxu0 0
        %1148 = vmatprep.subr.bf16.mxu0 0
        %1149 = vmatpush1.bf16.msra.mxu0 0
        %1150 = vmatprep.subr.bf16.mxu0 0
        %1151 = vmatpush1.bf16.msra.mxu0 0
        %1152 = vmatprep.subr.bf16.mxu0 0
        %1153 = vmatpush1.bf16.msra.mxu0 0
        %1154 = vmatprep.subr.bf16.mxu0 0
        %1155 = vmatpush1.bf16.msra.mxu0 0
        %1156 = vmatprep.subr.bf16.mxu0 0
        %1157 = vmatpush1.bf16.msra.mxu0 0
        %1158 = vmatprep.subr.bf16.mxu0 0
        %1159 = vmatpush1.bf16.msra.mxu0 0
        %1160 = vmatprep.subr.bf16.mxu0 0
        %1161 = vmatpush1.bf16.msra.mxu0 0
        %1162 = vmatprep.subr.bf16.mxu0 0
        %1163 = vmatpush1.bf16.msra.mxu0 0
        %1164 = vmatprep.mubr.bf16.mxu0 0
        %1165 = vmatmul.mubr.bf16.gmra.mrb[0].mxu0 %v1126
        %v1166 = vpop.f32.mrb[0].mxu0
        %v1167 = vadd.f32 0.0, %v1166
        %v1168 = vpop.f32.mrb[0].mxu0
        %v1169 = vpop.f32.mrb[0].mxu0
        %v1170 = vpop.f32.mrb[0].mxu0
        %1171 = vdwg.mxu0
        %1172 = vrot.lane.b32.xlu0 %v868, 64
        %v1173 = vpop.permute.xlu0 %1172
        %v1175 = vsel %vm881, %v1120, 0
        %v1178 = vsel %vm1128, %v1173, 0
        %1180 = vmatprep.subr.bf16.mxu0 0
        %1181 = vmatpush1.bf16.msra.mxu0 %v1178
        %1182 = vmatprep.subr.bf16.mxu0 0
        %1183 = vmatpush1.bf16.msra.mxu0 0
        %1184 = vmatprep.subr.bf16.mxu0 0
        %1185 = vmatpush1.bf16.msra.mxu0 0
        %1186 = vmatprep.subr.bf16.mxu0 0
        %1187 = vmatpush1.bf16.msra.mxu0 0
        %1188 = vmatprep.subr.bf16.mxu0 0
        %1189 = vmatpush1.bf16.msra.mxu0 0
        %1190 = vmatprep.subr.bf16.mxu0 0
        %1191 = vmatpush1.bf16.msra.mxu0 0
        %1192 = vmatprep.subr.bf16.mxu0 0
        %1193 = vmatpush1.bf16.msra.mxu0 0
        %1194 = vmatprep.subr.bf16.mxu0 0
        %1195 = vmatpush1.bf16.msra.mxu0 0
        %1196 = vmatprep.subr.bf16.mxu0 0
        %1197 = vmatpush1.bf16.msra.mxu0 0
        %1198 = vmatprep.subr.bf16.mxu0 0
        %1199 = vmatpush1.bf16.msra.mxu0 0
        %1200 = vmatprep.subr.bf16.mxu0 0
        %1201 = vmatpush1.bf16.msra.mxu0 0
        %1202 = vmatprep.subr.bf16.mxu0 0
        %1203 = vmatpush1.bf16.msra.mxu0 0
        %1204 = vmatprep.subr.bf16.mxu0 0
        %1205 = vmatpush1.bf16.msra.mxu0 0
        %1206 = vmatprep.subr.bf16.mxu0 0
        %1207 = vmatpush1.bf16.msra.mxu0 0
        %1208 = vmatprep.subr.bf16.mxu0 0
        %1209 = vmatpush1.bf16.msra.mxu0 0
        %1210 = vmatprep.subr.bf16.mxu0 0
        %1211 = vmatpush1.bf16.msra.mxu0 0
        %1212 = vmatprep.mubr.bf16.mxu0 0
        %1213 = vmatmul.mubr.bf16.gmra.mrb[0].mxu0 %v1175
        %v1214 = vpop.f32.mrb[0].mxu0
        %v1215 = vadd.f32 0.0, %v1214
        %v1216 = vpop.f32.mrb[0].mxu0
        %v1217 = vpop.f32.mrb[0].mxu0
        %v1218 = vpop.f32.mrb[0].mxu0
        %1219 = vdwg.mxu0
        %1220 = vrot.lane.b32.xlu0 %v869, 64
        %v1221 = vpop.permute.xlu0 %1220
        %v1223 = vsel %vm881, %v1121, 0
        %v1226 = vsel %vm1128, %v1221, 0
        %1228 = vmatprep.subr.bf16.mxu0 0
        %1229 = vmatpush1.bf16.msra.mxu0 %v1226
        %1230 = vmatprep.subr.bf16.mxu0 0
        %1231 = vmatpush1.bf16.msra.mxu0 0
        %1232 = vmatprep.subr.bf16.mxu0 0
        %1233 = vmatpush1.bf16.msra.mxu0 0
        %1234 = vmatprep.subr.bf16.mxu0 0
        %1235 = vmatpush1.bf16.msra.mxu0 0
        %1236 = vmatprep.subr.bf16.mxu0 0
        %1237 = vmatpush1.bf16.msra.mxu0 0
        %1238 = vmatprep.subr.bf16.mxu0 0
        %1239 = vmatpush1.bf16.msra.mxu0 0
        %1240 = vmatprep.subr.bf16.mxu0 0
        %1241 = vmatpush1.bf16.msra.mxu0 0
        %1242 = vmatprep.subr.bf16.mxu0 0
        %1243 = vmatpush1.bf16.msra.mxu0 0
        %1244 = vmatprep.subr.bf16.mxu0 0
        %1245 = vmatpush1.bf16.msra.mxu0 0
        %1246 = vmatprep.subr.bf16.mxu0 0
        %1247 = vmatpush1.bf16.msra.mxu0 0
        %1248 = vmatprep.subr.bf16.mxu0 0
        %1249 = vmatpush1.bf16.msra.mxu0 0
        %1250 = vmatprep.subr.bf16.mxu0 0
        %1251 = vmatpush1.bf16.msra.mxu0 0
        %1252 = vmatprep.subr.bf16.mxu0 0
        %1253 = vmatpush1.bf16.msra.mxu0 0
        %1254 = vmatprep.subr.bf16.mxu0 0
        %1255 = vmatpush1.bf16.msra.mxu0 0
        %1256 = vmatprep.subr.bf16.mxu0 0
        %1257 = vmatpush1.bf16.msra.mxu0 0
        %1258 = vmatprep.subr.bf16.mxu0 0
        %1259 = vmatpush1.bf16.msra.mxu0 0
        %1260 = vmatprep.mubr.bf16.mxu0 0
        %1261 = vmatmul.mubr.bf16.gmra.mrb[0].mxu0 %v1223
        %v1262 = vpop.f32.mrb[0].mxu0
        %v1263 = vadd.f32 0.0, %v1262
        %v1264 = vpop.f32.mrb[0].mxu0
        %v1265 = vpop.f32.mrb[0].mxu0
        %v1266 = vpop.f32.mrb[0].mxu0
        %1267 = vdwg.mxu0
        %1268 = vrot.lane.b32.xlu0 %v870, 64
        %v1269 = vpop.permute.xlu0 %1268
        %v1271 = vsel %vm881, %v1122, 0
        %v1274 = vsel %vm1128, %v1269, 0
        %1276 = vmatprep.subr.bf16.mxu0 0
        %1277 = vmatpush1.bf16.msra.mxu0 %v1274
        %1278 = vmatprep.subr.bf16.mxu0 0
        %1279 = vmatpush1.bf16.msra.mxu0 0
        %1280 = vmatprep.subr.bf16.mxu0 0
        %1281 = vmatpush1.bf16.msra.mxu0 0
        %1282 = vmatprep.subr.bf16.mxu0 0
        %1283 = vmatpush1.bf16.msra.mxu0 0
        %1284 = vmatprep.subr.bf16.mxu0 0
        %1285 = vmatpush1.bf16.msra.mxu0 0
        %1286 = vmatprep.subr.bf16.mxu0 0
        %1287 = vmatpush1.bf16.msra.mxu0 0
        %1288 = vmatprep.subr.bf16.mxu0 0
        %1289 = vmatpush1.bf16.msra.mxu0 0
        %1290 = vmatprep.subr.bf16.mxu0 0
        %1291 = vmatpush1.bf16.msra.mxu0 0
        %1292 = vmatprep.subr.bf16.mxu0 0
        %1293 = vmatpush1.bf16.msra.mxu0 0
        %1294 = vmatprep.subr.bf16.mxu0 0
        %1295 = vmatpush1.bf16.msra.mxu0 0
        %1296 = vmatprep.subr.bf16.mxu0 0
        %1297 = vmatpush1.bf16.msra.mxu0 0
        %1298 = vmatprep.subr.bf16.mxu0 0
        %1299 = vmatpush1.bf16.msra.mxu0 0
        %1300 = vmatprep.subr.bf16.mxu0 0
        %1301 = vmatpush1.bf16.msra.mxu0 0
        %1302 = vmatprep.subr.bf16.mxu0 0
        %1303 = vmatpush1.bf16.msra.mxu0 0
        %1304 = vmatprep.subr.bf16.mxu0 0
        %1305 = vmatpush1.bf16.msra.mxu0 0
        %1306 = vmatprep.subr.bf16.mxu0 0
        %1307 = vmatpush1.bf16.msra.mxu0 0
        %1308 = vmatprep.mubr.bf16.mxu0 0
        %1309 = vmatmul.mubr.bf16.gmra.mrb[0].mxu0 %v1271
        %v1310 = vpop.f32.mrb[0].mxu0
        %v1311 = vadd.f32 0.0, %v1310
        %v1312 = vpop.f32.mrb[0].mxu0
        %v1313 = vpop.f32.mrb[0].mxu0
        %v1314 = vpop.f32.mrb[0].mxu0
        %1315 = vdwg.mxu0
        %1317 = vrot.lane.b32.xlu0 %v1215, 8
        %v1318 = vpop.permute.xlu0 %1317
        %1321 = vrot.lane.b32.xlu0 %v1263, 16
        %v1322 = vpop.permute.xlu0 %1321
        %1325 = vrot.lane.b32.xlu0 %v1311, 24
        %v1326 = vpop.permute.xlu0 %1325
        %v1328 = vsel %vm881, %v1167, %v1318
        %vm1329 = vcmask 130048
        %v1330 = vsel %vm1329, %v1328, %v1322
        %vm1331 = vcmask 195584
        %v1332 = vsel %vm1331, %v1330, %v1326
        %v1333 = vld [vmem:[%s711] sm:$0xf]
        %v1334 = vld [vmem:[%s711 + $0x4] sm:$0xf]
        %v1335 = vld [vmem:[%s711 + $0x8] sm:$0xf]
        %v1336 = vld [vmem:[%s711 + $0xc] sm:$0xf]
        %v1337 = vld [vmem:[%s714] sm:$0x1]
        %v1338 = vpack.c.bf16 %v1332, %v1332
        %v1340 = vlaneseq
        %v1341 = vshrl.u32 %v1340, 7
        %v1342 = vsub.s32 0, %v1341
        %v1343 = vrot.slane %v1337, %v1342
        %v1349 = vunpack.c.l.b16 %v1333
        %v1350 = vunpack.c.l.b16 %v1334
        %v1351 = vunpack.c.l.b16 %v1335
        %v1352 = vunpack.c.l.b16 %v1336
        %v1353 = vpack.c.b16 %v1350, %v1349
        %v1354 = vpack.c.b16 %v1352, %v1351
        %v1358 = vsel %vm798, %v1338, 0
        %1360 = vmatprep.subr.bf16.mxu0 0
        %1361 = vmatpush1.bf16.msra.mxu0 %v1353
        %1362 = vmatprep.subr.bf16.mxu0 0
        %1363 = vmatpush1.bf16.msra.mxu0 %v1354
        %1364 = vmatprep.subr.bf16.mxu0 0
        %1365 = vmatpush1.bf16.msra.mxu0 0
        %1366 = vmatprep.subr.bf16.mxu0 0
        %1367 = vmatpush1.bf16.msra.mxu0 0
        %1368 = vmatprep.subr.bf16.mxu0 0
        %1369 = vmatpush1.bf16.msra.mxu0 0
        %1370 = vmatprep.subr.bf16.mxu0 0
        %1371 = vmatpush1.bf16.msra.mxu0 0
        %1372 = vmatprep.subr.bf16.mxu0 0
        %1373 = vmatpush1.bf16.msra.mxu0 0
        %1374 = vmatprep.subr.bf16.mxu0 0
        %1375 = vmatpush1.bf16.msra.mxu0 0
        %1376 = vmatprep.subr.bf16.mxu0 0
        %1377 = vmatpush1.bf16.msra.mxu0 0
        %1378 = vmatprep.subr.bf16.mxu0 0
        %1379 = vmatpush1.bf16.msra.mxu0 0
        %1380 = vmatprep.subr.bf16.mxu0 0
        %1381 = vmatpush1.bf16.msra.mxu0 0
        %1382 = vmatprep.subr.bf16.mxu0 0
        %1383 = vmatpush1.bf16.msra.mxu0 0
        %1384 = vmatprep.subr.bf16.mxu0 0
        %1385 = vmatpush1.bf16.msra.mxu0 0
        %1386 = vmatprep.subr.bf16.mxu0 0
        %1387 = vmatpush1.bf16.msra.mxu0 0
        %1388 = vmatprep.subr.bf16.mxu0 0
        %1389 = vmatpush1.bf16.msra.mxu0 0
        %1390 = vmatprep.subr.bf16.mxu0 0
        %1391 = vmatpush1.bf16.msra.mxu0 0
        %1392 = vmatprep.mubr.bf16.mxu0 0
        %1393 = vmatmul.mubr.bf16.gmra.mrb[0].mxu0 %v1358
        %v1394 = vpop.f32.mrb[0].mxu0
        %v1395 = vadd.f32 %v1343, %v1394
        %v1396 = vpop.f32.mrb[0].mxu0
        %v1397 = vpop.f32.mrb[0].mxu0
        %v1398 = vpop.f32.mrb[0].mxu0
        %1399 = vdwg.mxu0
        %v1400 = vadd.f32 %v1395, %v773
        %v1401 = vld [vmem:[%s718] sm:$0x1]
        %v1402 = vld [vmem:[%s718 + $0x1] sm:$0x1]
        %v1403 = vsel %vm798, %v1400, 0.0
        %1404 = vadd.xlane.f32.xlu0 %v1403
        %v1405 = vpop.xlane.xlu0 %1404
        %v1406 = vrcp.pop 32.0
        %v1407 = vmul.f32 %v1405, %v1406
        %v1408 = vsub.f32 %v1400, %v1407
        %v1409 = vmul.f32 %v1408, %v1408
        %v1410 = vsel %vm798, %v1409, 0.0
        %1411 = vadd.xlane.f32.xlu0 %v1410
        %v1412 = vpop.xlane.xlu0 %1411
        %v1413 = vmul.f32 %v1412, %v1406
        %v1414 = vadd.f32 %v1413, 1e-12
        %v1415 = vrsqrt.pop %v1414
        %v1416 = vmul.f32 %v1408, %v1415
        %v1417 = vlaneseq
        %v1418 = vshrl.u32 %v1417, 7
        %v1419 = vsub.s32 0, %v1418
        %v1420 = vrot.slane %v1401, %v1419
        %v1421 = vmul.f32 %v1416, %v1420
        %v1422 = vlaneseq
        %v1423 = vshrl.u32 %v1422, 7
        %v1424 = vsub.s32 0, %v1423
        %v1425 = vrot.slane %v1402, %v1424
        %v1426 = vadd.f32 %v1421, %v1425
        %v1427 = vld [vmem:[%s723] sm:$0xf]
        %v1428 = vld [vmem:[%s723 + $0x4] sm:$0xf]
        %v1429 = vld [vmem:[%s723 + $0x8] sm:$0xf]
        %v1430 = vld [vmem:[%s723 + $0xc] sm:$0xf]
        %v1431 = vld [vmem:[%s726] sm:$0x1]
        %v1432 = vpack.c.bf16 %v1426, %v1426
        %v1434 = vlaneseq
        %v1435 = vshrl.u32 %v1434, 7
        %v1436 = vsub.s32 0, %v1435
        %v1437 = vrot.slane %v1431, %v1436
        %v1443 = vunpack.c.l.b16 %v1427
        %v1444 = vunpack.c.l.b16 %v1428
        %v1445 = vunpack.c.l.b16 %v1429
        %v1446 = vunpack.c.l.b16 %v1430
        %v1447 = vpack.c.b16 %v1444, %v1443
        %v1448 = vpack.c.b16 %v1446, %v1445
        %v1452 = vsel %vm798, %v1432, 0
        %1454 = vmatprep.subr.bf16.mxu0 0
        %1455 = vmatpush1.bf16.msra.mxu0 %v1447
        %1456 = vmatprep.subr.bf16.mxu0 0
        %1457 = vmatpush1.bf16.msra.mxu0 %v1448
        %1458 = vmatprep.subr.bf16.mxu0 0
        %1459 = vmatpush1.bf16.msra.mxu0 0
        %1460 = vmatprep.subr.bf16.mxu0 0
        %1461 = vmatpush1.bf16.msra.mxu0 0
        %1462 = vmatprep.subr.bf16.mxu0 0
        %1463 = vmatpush1.bf16.msra.mxu0 0
        %1464 = vmatprep.subr.bf16.mxu0 0
        %1465 = vmatpush1.bf16.msra.mxu0 0
        %1466 = vmatprep.subr.bf16.mxu0 0
        %1467 = vmatpush1.bf16.msra.mxu0 0
        %1468 = vmatprep.subr.bf16.mxu0 0
        %1469 = vmatpush1.bf16.msra.mxu0 0
        %1470 = vmatprep.subr.bf16.mxu0 0
        %1471 = vmatpush1.bf16.msra.mxu0 0
        %1472 = vmatprep.subr.bf16.mxu0 0
        %1473 = vmatpush1.bf16.msra.mxu0 0
        %1474 = vmatprep.subr.bf16.mxu0 0
        %1475 = vmatpush1.bf16.msra.mxu0 0
        %1476 = vmatprep.subr.bf16.mxu0 0
        %1477 = vmatpush1.bf16.msra.mxu0 0
        %1478 = vmatprep.subr.bf16.mxu0 0
        %1479 = vmatpush1.bf16.msra.mxu0 0
        %1480 = vmatprep.subr.bf16.mxu0 0
        %1481 = vmatpush1.bf16.msra.mxu0 0
        %1482 = vmatprep.subr.bf16.mxu0 0
        %1483 = vmatpush1.bf16.msra.mxu0 0
        %1484 = vmatprep.subr.bf16.mxu0 0
        %1485 = vmatpush1.bf16.msra.mxu0 0
        %1486 = vmatprep.mubr.bf16.mxu0 0
        %1487 = vmatmul.mubr.bf16.gmra.mrb[0].mxu0 %v1452
        %v1488 = vpop.f32.mrb[0].mxu0
        %v1489 = vadd.f32 %v1437, %v1488
        %v1490 = vpop.f32.mrb[0].mxu0
        %v1491 = vpop.f32.mrb[0].mxu0
        %v1492 = vpop.f32.mrb[0].mxu0
        %1493 = vdwg.mxu0
        %v1494 = vmul.f32 %v1489, 0.5
        %v1495 = vmul.f32 %v1489, 0.044715
        %v1496 = vmul.f32 %v1495, %v1489
        %v1497 = vmul.f32 %v1496, %v1489
        %v1498 = vadd.f32 %v1489, %v1497
        %v1499 = vmul.f32 %v1498, 0.7978846
        %v1500 = vtanh.pop %v1499
        %v1501 = vadd.f32 %v1500, 1.0
        %v1502 = vmul.f32 %v1494, %v1501
        %v1503 = vld [vmem:[%s731] sm:$0xf]
        %v1504 = vld [vmem:[%s731 + $0x4] sm:$0xf]
        %v1505 = vld [vmem:[%s731 + $0x8] sm:$0xf]
        %v1506 = vld [vmem:[%s731 + $0xc] sm:$0xf]
        %v1507 = vld [vmem:[%s731 + $0x10] sm:$0xf]
        %v1508 = vld [vmem:[%s731 + $0x14] sm:$0xf]
        %v1509 = vld [vmem:[%s731 + $0x18] sm:$0xf]
        %v1510 = vld [vmem:[%s731 + $0x1c] sm:$0xf]
        %v1511 = vld [vmem:[%s734] sm:$0x1]
        %v1512 = vpack.c.bf16 %v1502, %v1502
        %v1514 = vlaneseq
        %v1515 = vshrl.u32 %v1514, 7
        %v1516 = vsub.s32 0, %v1515
        %v1517 = vrot.slane %v1511, %v1516
        %v1527 = vunpack.c.l.b16 %v1503
        %v1528 = vunpack.c.l.b16 %v1504
        %v1529 = vunpack.c.l.b16 %v1505
        %v1530 = vunpack.c.l.b16 %v1506
        %v1531 = vunpack.c.l.b16 %v1507
        %v1532 = vunpack.c.l.b16 %v1508
        %v1533 = vunpack.c.l.b16 %v1509
        %v1534 = vunpack.c.l.b16 %v1510
        %v1535 = vpack.c.b16 %v1528, %v1527
        %v1536 = vpack.c.b16 %v1530, %v1529
        %v1537 = vpack.c.b16 %v1532, %v1531
        %v1538 = vpack.c.b16 %v1534, %v1533
        %vm1543 = vcmask 523264
        %v1545 = vsel %vm1543, %v1512, 0
        %1547 = vmatprep.subr.bf16.mxu0 0
        %1548 = vmatpush1.bf16.msra.mxu0 %v1535
        %1549 = vmatprep.subr.bf16.mxu0 0
        %1550 = vmatpush1.bf16.msra.mxu0 %v1536
        %1551 = vmatprep.subr.bf16.mxu0 0
        %1552 = vmatpush1.bf16.msra.mxu0 %v1537
        %1553 = vmatprep.subr.bf16.mxu0 0
        %1554 = vmatpush1.bf16.msra.mxu0 %v1538
        %1555 = vmatprep.subr.bf16.mxu0 0
        %1556 = vmatpush1.bf16.msra.mxu0 0
        %1557 = vmatprep.subr.bf16.mxu0 0
        %1558 = vmatpush1.bf16.msra.mxu0 0
        %1559 = vmatprep.subr.bf16.mxu0 0
        %1560 = vmatpush1.bf16.msra.mxu0 0
        %1561 = vmatprep.subr.bf16.mxu0 0
        %1562 = vmatpush1.bf16.msra.mxu0 0
        %1563 = vmatprep.subr.bf16.mxu0 0
        %1564 = vmatpush1.bf16.msra.mxu0 0
        %1565 = vmatprep.subr.bf16.mxu0 0
        %1566 = vmatpush1.bf16.msra.mxu0 0
        %1567 = vmatprep.subr.bf16.mxu0 0
        %1568 = vmatpush1.bf16.msra.mxu0 0
        %1569 = vmatprep.subr.bf16.mxu0 0
        %1570 = vmatpush1.bf16.msra.mxu0 0
        %1571 = vmatprep.subr.bf16.mxu0 0
        %1572 = vmatpush1.bf16.msra.mxu0 0
        %1573 = vmatprep.subr.bf16.mxu0 0
        %1574 = vmatpush1.bf16.msra.mxu0 0
        %1575 = vmatprep.subr.bf16.mxu0 0
        %1576 = vmatpush1.bf16.msra.mxu0 0
        %1577 = vmatprep.subr.bf16.mxu0 0
        %1578 = vmatpush1.bf16.msra.mxu0 0
        %1579 = vmatprep.mubr.bf16.mxu0 0
        %1580 = vmatmul.mubr.bf16.gmra.mrb[0].mxu0 %v1545
        %v1581 = vpop.f32.mrb[0].mxu0
        %v1582 = vadd.f32 %v1517, %v1581
        %v1583 = vpop.f32.mrb[0].mxu0
        %v1584 = vpop.f32.mrb[0].mxu0
        %v1585 = vpop.f32.mrb[0].mxu0
        %1586 = vdwg.mxu0
        %v1587 = vadd.f32 %v1582, %v1426
        %v1588 = vld [vmem:[%s738] sm:$0x1]
        %v1589 = vld [vmem:[%s738 + $0x1] sm:$0x1]
        %v1590 = vsel %vm798, %v1587, 0.0
        %1591 = vadd.xlane.f32.xlu0 %v1590
        %v1592 = vpop.xlane.xlu0 %1591
        %v1593 = vmul.f32 %v1592, %v1406
        %v1594 = vsub.f32 %v1587, %v1593
        %v1595 = vmul.f32 %v1594, %v1594
        %v1596 = vsel %vm798, %v1595, 0.0
        %1597 = vadd.xlane.f32.xlu0 %v1596
        %v1598 = vpop.xlane.xlu0 %1597
        %v1599 = vmul.f32 %v1598, %v1406
        %v1600 = vadd.f32 %v1599, 1e-12
        %v1601 = vrsqrt.pop %v1600
        %v1602 = vmul.f32 %v1594, %v1601
        %v1603 = vlaneseq
        %v1604 = vshrl.u32 %v1603, 7
        %v1605 = vsub.s32 0, %v1604
        %v1606 = vrot.slane %v1588, %v1605
        %v1607 = vmul.f32 %v1602, %v1606
        %v1608 = vlaneseq
        %v1609 = vshrl.u32 %v1608, 7
        %v1610 = vsub.s32 0, %v1609
        %v1611 = vrot.slane %v1589, %v1610
        %v1612 = vadd.f32 %v1607, %v1611
        %1613 = vst.msk [vmem:[#allocation2] sm:$0xff] %vm798, %v1612
        %p1614 = scmp.eq.s32.totalorder %s36, 1
        // Predicated region
        $region93: #{custom_bert_classifier.1} parent=87 // pred_check
          %p1615 = pneg %p1614
        $region94: #{custom_bert_classifier.1} parent=87 // pred_check_branch
          %1617 = sbr.rel (%p1615) target = $region96
        $region95: #{custom_bert_classifier.1} parent=87 // pred_region
          %v1618 = vld [vmem:[%s13] sm:$0xf]
          %v1619 = vld [vmem:[%s13 + $0x4] sm:$0xf]
          %v1620 = vld [vmem:[%s13 + $0x8] sm:$0xf]
          %v1621 = vld [vmem:[%s13 + $0xc] sm:$0xf]
          %v1622 = vld [vmem:[%s14] sm:$0x1]
          %v1623 = vpack.c.bf16 %v1612, %v1612
          %v1628 = vunpack.c.l.b16 %v1618
          %v1629 = vunpack.c.l.b16 %v1619
          %v1630 = vunpack.c.l.b16 %v1620
          %v1631 = vunpack.c.l.b16 %v1621
          %v1632 = vpack.c.b16 %v1629, %v1628
          %v1633 = vpack.c.b16 %v1631, %v1630
          %v1637 = vsel %vm798, %v1623, 0
          %1639 = vmatprep.subr.bf16.mxu0 0
          %1640 = vmatpush1.bf16.msra.mxu0 %v1632
          %1641 = vmatprep.subr.bf16.mxu0 0
          %1642 = vmatpush1.bf16.msra.mxu0 %v1633
          %1643 = vmatprep.subr.bf16.mxu0 0
          %1644 = vmatpush1.bf16.msra.mxu0 0
          %1645 = vmatprep.subr.bf16.mxu0 0
          %1646 = vmatpush1.bf16.msra.mxu0 0
          %1647 = vmatprep.subr.bf16.mxu0 0
          %1648 = vmatpush1.bf16.msra.mxu0 0
          %1649 = vmatprep.subr.bf16.mxu0 0
          %1650 = vmatpush1.bf16.msra.mxu0 0
          %1651 = vmatprep.subr.bf16.mxu0 0
          %1652 = vmatpush1.bf16.msra.mxu0 0
          %1653 = vmatprep.subr.bf16.mxu0 0
          %1654 = vmatpush1.bf16.msra.mxu0 0
          %1655 = vmatprep.subr.bf16.mxu0 0
          %1656 = vmatpush1.bf16.msra.mxu0 0
          %1657 = vmatprep.subr.bf16.mxu0 0
          %1658 = vmatpush1.bf16.msra.mxu0 0
          %1659 = vmatprep.subr.bf16.mxu0 0
          %1660 = vmatpush1.bf16.msra.mxu0 0
          %1661 = vmatprep.subr.bf16.mxu0 0
          %1662 = vmatpush1.bf16.msra.mxu0 0
          %1663 = vmatprep.subr.bf16.mxu0 0
          %1664 = vmatpush1.bf16.msra.mxu0 0
          %1665 = vmatprep.subr.bf16.mxu0 0
          %1666 = vmatpush1.bf16.msra.mxu0 0
          %1667 = vmatprep.subr.bf16.mxu0 0
          %1668 = vmatpush1.bf16.msra.mxu0 0
          %1669 = vmatprep.subr.bf16.mxu0 0
          %1670 = vmatpush1.bf16.msra.mxu0 0
          %1671 = vmatprep.mubr.bf16.mxu0 0
          %1672 = vmatmul.mubr.bf16.gmra.mrb[0].mxu0 %v1637
          %v1673 = vpop.f32.mrb[0].mxu0
          %v1674 = vadd.f32 %v1622, %v1673
          %v1675 = vpop.f32.mrb[0].mxu0
          %v1676 = vpop.f32.mrb[0].mxu0
          %v1677 = vpop.f32.mrb[0].mxu0
          %1678 = vdwg.mxu0
          %v1679 = vtanh.pop %v1674
          %v1680 = vld [vmem:[%s15] sm:$0xf]
          %v1681 = vld [vmem:[%s15 + $0x4] sm:$0xf]
          %v1682 = vld [vmem:[%s15 + $0x8] sm:$0xf]
          %v1683 = vld [vmem:[%s15 + $0xc] sm:$0xf]
          %v1684 = vld [vmem:[%s16] sm:$0x1]
          %v1685 = vpack.c.bf16 %v1679, %v1679
          %v1690 = vunpack.c.l.b16 %v1680
          %v1691 = vunpack.c.l.b16 %v1681
          %v1692 = vunpack.c.l.b16 %v1682
          %v1693 = vunpack.c.l.b16 %v1683
          %v1694 = vpack.c.b16 %v1691, %v1690
          %v1695 = vpack.c.b16 %v1693, %v1692
          %v1699 = vsel %vm798, %v1685, 0
          %1701 = vmatprep.subr.bf16.mxu0 0
          %1702 = vmatpush1.bf16.msra.mxu0 %v1694
          %1703 = vmatprep.subr.bf16.mxu0 0
          %1704 = vmatpush1.bf16.msra.mxu0 %v1695
          %1705 = vmatprep.subr.bf16.mxu0 0
          %1706 = vmatpush1.bf16.msra.mxu0 0
          %1707 = vmatprep.subr.bf16.mxu0 0
          %1708 = vmatpush1.bf16.msra.mxu0 0
          %1709 = vmatprep.subr.bf16.mxu0 0
          %1710 = vmatpush1.bf16.msra.mxu0 0
          %1711 = vmatprep.subr.bf16.mxu0 0
          %1712 = vmatpush1.bf16.msra.mxu0 0
          %1713 = vmatprep.subr.bf16.mxu0 0
          %1714 = vmatpush1.bf16.msra.mxu0 0
          %1715 = vmatprep.subr.bf16.mxu0 0
          %1716 = vmatpush1.bf16.msra.mxu0 0
          %1717 = vmatprep.subr.bf16.mxu0 0
          %1718 = vmatpush1.bf16.msra.mxu0 0
          %1719 = vmatprep.subr.bf16.mxu0 0
          %1720 = vmatpush1.bf16.msra.mxu0 0
          %1721 = vmatprep.subr.bf16.mxu0 0
          %1722 = vmatpush1.bf16.msra.mxu0 0
          %1723 = vmatprep.subr.bf16.mxu0 0
          %1724 = vmatpush1.bf16.msra.mxu0 0
          %1725 = vmatprep.subr.bf16.mxu0 0
          %1726 = vmatpush1.bf16.msra.mxu0 0
          %1727 = vmatprep.subr.bf16.mxu0 0
          %1728 = vmatpush1.bf16.msra.mxu0 0
          %1729 = vmatprep.subr.bf16.mxu0 0
          %1730 = vmatpush1.bf16.msra.mxu0 0
          %1731 = vmatprep.subr.bf16.mxu0 0
          %1732 = vmatpush1.bf16.msra.mxu0 0
          %1733 = vmatprep.mubr.bf16.mxu0 0
          %1734 = vmatmul.mubr.bf16.gmra.mrb[0].mxu0 %v1699
          %v1735 = vpop.f32.mrb[0].mxu0
          %v1736 = vadd.f32 %v1684, %v1735
          %v1737 = vpop.f32.mrb[0].mxu0
          %v1738 = vpop.f32.mrb[0].mxu0
          %v1739 = vpop.f32.mrb[0].mxu0
          %1740 = vdwg.mxu0
          %1741 = vst [vmem:[%s691] sm:$0x1] %v1736
        $region96: #{custom_bert_classifier.1} parent=87 // pred_fallthru
          _
        %s1742 = sand.u32 %s468, 1
        %s1743 = scalar_lea.sflag [#allocation4], %s1742
        %s1744 = sand.u32 %s468, 1
        %s1745 = scalar_lea.vmem [#allocation3], %s1744
        // Predicated region
        $region97: #{custom_bert_classifier.1} parent=87 // pred_check
          %p1746 = pneg %p478
        $region98: #{custom_bert_classifier.1} parent=87 // pred_check_branch
          %1748 = sbr.rel (%p1746) target = $region100
        $region99: #{custom_bert_classifier.1} parent=87 // pred_region
          %s1750 = ssub.s32 16, 16
          %1751 = vsyncadd %s1743, %s1750
          %s1752 = smul.addr %s35, 16
          %s1753 = scalar_lea.hbm %s17, %s1752
          %s1755 = sshll.u32 %s1745, 4
          %s1756 = int_to_ptr.vmem [resolvable:$true] %s1755
          %1758 = dma.vmem_to_hbm [thread:$0]  %s1756, 16, %s1753, %s1743
        $region100: #{custom_bert_classifier.1} parent=87 // pred_fallthru
          _
      $region88: #{custom_bert_classifier.1} parent=5 // pred_fallthru
        _
      %p1759 = scmp.le.s32.totalorder 2, %s26
      // Predicated region
      $region101: #{custom_bert_classifier.1} parent=5 // pred_check
        %p1760 = pneg %p1759
      $region102: #{custom_bert_classifier.1} parent=5 // pred_check_branch
        %1762 = sbr.rel (%p1760) target = $region104
      $region103: #{custom_bert_classifier.1} parent=5 // pred_region
        %s1763 = ssub.s32 %s26, 2
        // Predicated region
        $region105: #{custom_bert_classifier.1} parent=103 // pred_check
          %p1764 = pneg %p484
        $region106: #{custom_bert_classifier.1} parent=103 // pred_check_branch
          %1766 = sbr.rel (%p1764) target = $region108
        $region107: #{custom_bert_classifier.1} parent=103 // pred_region
          %s1767 = sand.u32 %s469, 1
          %s1768 = scalar_lea.sflag [#allocation4], %s1767
          %s1769 = sand.u32 %s469, 1
          %s1770 = scalar_lea.vmem [#allocation3], %s1769
          %1771 = dma.done %s1768, 16
        $region108: #{custom_bert_classifier.1} parent=103 // pred_fallthru
          _
      $region104: #{custom_bert_classifier.1} parent=5 // pred_fallthru
        _
    $region6: #{custom_bert_classifier.1} parent=1 // loop_footer
      %s30 = sadd.s32 1, %s26
    $region7: #{custom_bert_classifier.1} parent=1 // loop_footer_branch
      %25 = sbr.rel target = $region3
    $region8: #{custom_bert_classifier.1} parent=1 // loop_exit
      _
    %1772 = vsyncpa [#allocation4], 1
    %s1773 = scalar_lea.sflag [#allocation4], 1
    %1774 = vsyncpa %s1773, 1

</llo_original>
